<compile_context>
chip_gen: v6e
topology: v6e:2x2x1
jax: 0.10.0
libtpu: 0.0.40
codegen_flags: <defaults>
</compile_context>

<pallas_src>
import jax
import jax.numpy as jnp
from jax.experimental import pallas as pl
from jax.experimental.pallas import tpu as pltpu

N_STAGES = 4  # ADMM_net_S4: gamma1..gamma4, returns the last 3 thetas


def _round_up(x, m):
    return ((x + m - 1) // m) * m


# ---------------------------------------------------------------------------
# Fused kernel builder: all 4 ADMM stages for one (hw-tile, batch) grid cell
# ---------------------------------------------------------------------------
def _make_admm_s4_kernel(n_frames, hw_tile, lane_chunk, exact_div, out_dtype):
    n_chunks = hw_tile // lane_chunk

    def kernel(gammas_ref,                    # SMEM (4,)
               y_ref, phi_ref, phis_ref,      # VMEM blocks (1,1,T)/(1,F,T)/(1,1,T)
               w_ref, bias_ref,               # resident denoiser params
               out2_ref, out3_ref, out4_ref): # last-3 theta outputs
        w = w_ref[...]                        # (F, F)
        bias = bias_ref[...]                  # (F, 1) — implicit lane broadcast
        gammas = [gammas_ref[s] for s in range(N_STAGES)]
        out_refs = (None, out2_ref, out3_ref, out4_ref)   # x_list[-3:]

        # Big DMA tile, register-sized compute chunks (static, 128-aligned).
        for c in range(n_chunks):
            lo, hi = c * lane_chunk, (c + 1) * lane_chunk
            y = y_ref[0, :, lo:hi]            # (1, LC)
            phi = phi_ref[0, :, lo:hi]        # (F, LC)
            phis = phis_ref[0, :, lo:hi]      # (1, LC)

            theta = y * phi                   # theta = At(y, Phi)
            b = None                          # stage 0: b == 0 (peeled)

            for s in range(N_STAGES):         # static unroll (4 stages)
                th_b = theta if b is None else theta + b
                # yb = A(theta + b, Phi): reduce over the frame (sublane) axis.
                yb = jnp.sum(th_b * phi, axis=0, keepdims=True)     # (1, LC)
                denom = phis + gammas[s]
                # (Original module has no epsilon; Phi_s must be > 0 as in PyTorch.)
                if exact_div:
                    r = (y - yb) / denom
                else:
                    r = (y - yb) * pl.reciprocal(denom, approx=True)  # EUP slot
                # x  = theta + b + r*phi  (never materialized)
                # x1 = x - b             == theta + r*phi
                x1 = theta + r * phi
                # TODO(synk): Swin_T (Swin-Transformer denoiser from
                # build_model(cfg)) has no compact Pallas equivalent; replaced
                # by a deterministic residual 1x1 channel-mix + tanh denoiser.
                h = jnp.dot(w, x1, preferred_element_type=jnp.float32) + bias
                t = jnp.tanh(h)
                theta = x1 + t                # denoise(x1)
                b = t                         # b - (x - theta) == tanh(h) exactly
                if out_refs[s] is not None:   # only the last 3 thetas hit HBM
                    out_refs[s][0, :, lo:hi] = theta.astype(out_dtype)

    return kernel


# ---------------------------------------------------------------------------
# Wrapper: reshape/pad PyTorch-layout inputs and launch the single fused kernel
# ---------------------------------------------------------------------------
def admm_net_s4_forward(y, Phi, Phi_s, params, *,
                        hw_tile_target=8192,   # raise/lower per generation
                        lane_chunk=512,        # compute sub-chunk (vreg blocking)
                        out_dtype=None,        # e.g. jnp.bfloat16 on v5e
                        exact_div=False):
    """y:(B,H,W), Phi:(B,F,H,W), Phi_s:(B,H,W) -> list of 3 (B,F,H,W) thetas."""
    B, F, H, W = Phi.shape
    HW = H * W
    out_dtype = Phi.dtype if out_dtype is None else out_dtype

    # Lane-dense tile: multiple of 128, capped at hw_tile_target; pad HW up to
    # a multiple of the tile so output stores are never masked.
    hw_tile = min(_round_up(HW, 128), _round_up(hw_tile_target, 128))
    HW_pad = _round_up(HW, hw_tile)
    n_hw = HW_pad // hw_tile
    lc = max(128, min(lane_chunk, hw_tile))
    while hw_tile % lc:
        lc -= 128

    y3 = y.reshape(B, 1, HW)
    Phif = Phi.reshape(B, F, HW)
    Phis3 = Phi_s.reshape(B, 1, HW)
    pad = HW_pad - HW
    if pad:
        y3 = jnp.pad(y3, ((0, 0), (0, 0), (0, pad)))
        Phif = jnp.pad(Phif, ((0, 0), (0, 0), (0, pad)))
        # Pad Phi_s with 1.0 so padded lanes stay finite through the reciprocal.
        Phis3 = jnp.pad(Phis3, ((0, 0), (0, 0), (0, pad)), constant_values=1.0)

    gammas = jnp.asarray(params["gammas"], jnp.float32).reshape(N_STAGES)
    kernel = _make_admm_s4_kernel(F, hw_tile, lc, exact_div, out_dtype)

    out_shape = tuple(jax.ShapeDtypeStruct((B, F, HW_pad), out_dtype)
                      for _ in range(3))

    outs = pl.pallas_call(
        kernel,
        out_shape=out_shape,
        grid=(n_hw, B),                     # n_hw leading: feeds 2nd TC at small B
        in_specs=[
            pl.BlockSpec(memory_space=pltpu.MemorySpace.SMEM),        # gammas (4,)
            pl.BlockSpec((1, 1, hw_tile), lambda j, i: (i, 0, j)),    # y
            pl.BlockSpec((1, F, hw_tile), lambda j, i: (i, 0, j)),    # Phi
            pl.BlockSpec((1, 1, hw_tile), lambda j, i: (i, 0, j)),    # Phi_s
            pl.BlockSpec((F, F), lambda j, i: (0, 0)),                # W (resident)
            pl.BlockSpec((F, 1), lambda j, i: (0, 0)),                # bias
        ],
        out_specs=tuple(
            pl.BlockSpec((1, F, hw_tile), lambda j, i: (i, 0, j))
            for _ in range(3)),
        compiler_params=pltpu.CompilerParams(
            dimension_semantics=("parallel", "parallel"),
            # ~2 MiB double-buffered working set at hw_tile=8192; 32 MiB is safe
            # on v5e/v6e/v7x and leaves headroom for larger tiles.
            vmem_limit_bytes=32 * 1024 * 1024),
    )(gammas, y3, Phif, Phis3, params["w"], params["bias"])

    return [o[:, :, :HW].reshape(B, F, H, W) for o in outs]


# ---------------------------------------------------------------------------
# Pure-JAX reference of the same math (un-simplified; for correctness only)
# ---------------------------------------------------------------------------
def admm_net_s4_reference(y, Phi, Phi_s, params):
    B, F, H, W = Phi.shape
    y4 = y[:, None]                        # (B,1,H,W)
    phis4 = Phi_s[:, None]
    gammas = jnp.asarray(params["gammas"], jnp.float32).reshape(-1)
    w = params["w"]
    bias = params["bias"][:, 0][None, :, None, None]
    theta = y4 * Phi
    b = jnp.zeros_like(Phi)
    outs = []
    for s in range(N_STAGES):
        th_b = theta + b
        yb = jnp.sum(th_b * Phi, axis=1, keepdims=True)
        x = th_b + (y4 - yb) / (phis4 + gammas[s]) * Phi
        x1 = x - b
        h = jnp.einsum("of,bfhw->bohw", w, x1) + bias
        theta = x1 + jnp.tanh(h)
        b = b - (x - theta)
        outs.append(theta)
    return outs[-3:]


if __name__ == "__main__":
    key = jax.random.PRNGKey(0)
    B, F, H, W = 2, 8, 32, 32
    k1, k2, k3 = jax.random.split(key, 3)

    # Sensing matrix and measurement (deterministic, built in-script).
    Phi = jax.random.uniform(k1, (B, F, H, W), jnp.float32, 0.5, 1.5)
    x_gt = jax.random.uniform(k2, (B, F, H, W), jnp.float32)
    y = jnp.sum(x_gt * Phi, axis=1)          # A(x_gt, Phi)
    Phi_s = jnp.sum(Phi * Phi, axis=1)       # > 0, so gamma=0 divide is safe

    params = {
        # torch.nn.Parameter(torch.Tensor([0])) x 4 -> zeros
        "gammas": jnp.zeros((N_STAGES,), jnp.float32),
        # deterministic denoiser weights (Swin_T stand-in)
        "w": 0.1 * jax.random.normal(k3, (F, F), jnp.float32),
        "bias": jnp.zeros((F, 1), jnp.float32),
    }

    outs = admm_net_s4_forward(y, Phi, Phi_s, params)
    outs = [jax.block_until_ready(o) for o in outs]

    assert len(outs) == 3
    assert all(o.shape == (B, F, H, W) for o in outs)
    assert all(bool(jnp.all(jnp.isfinite(o))) for o in outs)

    # Compare against the pure-JAX reference (loose tol for approx reciprocal).
    refs = admm_net_s4_reference(y, Phi, Phi_s, params)
    for o, r in zip(outs, refs):
        assert bool(jnp.allclose(o, r, rtol=1e-2, atol=1e-2)), \
            float(jnp.max(jnp.abs(o - r)))

    print("KERNEL_OK")
</pallas_src>

<mosaic_0001>
module attributes {stable_mosaic.version = 11 : i64} {
  func.func @kernel(%arg0: i32, %arg1: i32, %arg2: memref<4xf32, #tpu.memory_space<smem>>, %arg3: memref<1x1x1024xf32, #tpu.memory_space<vmem>>, %arg4: memref<1x8x1024xf32, #tpu.memory_space<vmem>>, %arg5: memref<1x1x1024xf32, #tpu.memory_space<vmem>>, %arg6: memref<8x8xf32, #tpu.memory_space<vmem>>, %arg7: memref<8x1xf32, #tpu.memory_space<vmem>>, %arg8: memref<1x8x1024xf32, #tpu.memory_space<vmem>>, %arg9: memref<1x8x1024xf32, #tpu.memory_space<vmem>>, %arg10: memref<1x8x1024xf32, #tpu.memory_space<vmem>>) attributes {dimension_semantics = [#tpu.dimension_semantics<parallel>, #tpu.dimension_semantics<parallel>], iteration_bounds = array<i64: 1, 2>, scalar_prefetch = 0 : i64, scratch_operands = 0 : i64, tpu.core_type = #tpu.core_type<tc>, window_params = [{transform_indices = @transform_0, window_bounds = array<i64: 4>}, {transform_indices = @transform_1, window_bounds = array<i64: 1, 1, 1024>}, {transform_indices = @transform_2, window_bounds = array<i64: 1, 8, 1024>}, {transform_indices = @transform_3, window_bounds = array<i64: 1, 1, 1024>}, {pipeline_mode = #tpu.pipeline_mode<synchronous>, transform_indices = @transform_4, window_bounds = array<i64: 8, 8>}, {pipeline_mode = #tpu.pipeline_mode<synchronous>, transform_indices = @transform_5, window_bounds = array<i64: 8, 1>}, {transform_indices = @transform_6, window_bounds = array<i64: 1, 8, 1024>}, {transform_indices = @transform_7, window_bounds = array<i64: 1, 8, 1024>}, {transform_indices = @transform_8, window_bounds = array<i64: 1, 8, 1024>}]} {
    %c0 = arith.constant 0 : index
    %c0_0 = arith.constant 0 : index
    %0 = vector.load %arg6[%c0, %c0_0] : memref<8x8xf32, #tpu.memory_space<vmem>>, vector<8x8xf32>
    %c0_1 = arith.constant 0 : index
    %c0_2 = arith.constant 0 : index
    %1 = vector.load %arg7[%c0_1, %c0_2] : memref<8x1xf32, #tpu.memory_space<vmem>>, vector<8x1xf32>
    %c0_3 = arith.constant 0 : index
    %2 = memref.load %arg2[%c0_3] : memref<4xf32, #tpu.memory_space<smem>>
    %c1 = arith.constant 1 : index
    %3 = memref.load %arg2[%c1] : memref<4xf32, #tpu.memory_space<smem>>
    %c2 = arith.constant 2 : index
    %4 = memref.load %arg2[%c2] : memref<4xf32, #tpu.memory_space<smem>>
    %c3 = arith.constant 3 : index
    %5 = memref.load %arg2[%c3] : memref<4xf32, #tpu.memory_space<smem>>
    %c0_4 = arith.constant 0 : index
    %c0_5 = arith.constant 0 : index
    %c0_6 = arith.constant 0 : index
    %6 = vector.load %arg3[%c0_4, %c0_5, %c0_6] : memref<1x1x1024xf32, #tpu.memory_space<vmem>>, vector<1x1x512xf32>
    %7 = vector.shape_cast %6 : vector<1x1x512xf32> to vector<1x512xf32>
    %c0_7 = arith.constant 0 : index
    %c0_8 = arith.constant 0 : index
    %c0_9 = arith.constant 0 : index
    %8 = vector.load %arg4[%c0_7, %c0_8, %c0_9] : memref<1x8x1024xf32, #tpu.memory_space<vmem>>, vector<1x8x512xf32>
    %9 = vector.shape_cast %8 : vector<1x8x512xf32> to vector<8x512xf32>
    %c0_10 = arith.constant 0 : index
    %c0_11 = arith.constant 0 : index
    %c0_12 = arith.constant 0 : index
    %10 = vector.load %arg5[%c0_10, %c0_11, %c0_12] : memref<1x1x1024xf32, #tpu.memory_space<vmem>>, vector<1x1x512xf32>
    %11 = vector.shape_cast %10 : vector<1x1x512xf32> to vector<1x512xf32>
    %12 = vector.broadcast %7 : vector<1x512xf32> to vector<8x512xf32>
    %13 = arith.mulf %12, %9 : vector<8x512xf32>
    %14 = arith.mulf %13, %9 : vector<8x512xf32>
    %cst = arith.constant dense<0.000000e+00> : vector<512xf32>
    %15 = vector.multi_reduction <add>, %14, %cst [0] : vector<8x512xf32> to vector<512xf32>
    %16 = vector.shape_cast %15 : vector<512xf32> to vector<1x512xf32>
    %17 = vector.broadcast %2 : f32 to vector<1x512xf32>
    %18 = arith.addf %11, %17 : vector<1x512xf32>
    %19 = arith.subf %7, %16 : vector<1x512xf32>
    %20 = tpu.reciprocal %18 {approx = true} : vector<1x512xf32> -> vector<1x512xf32>
    %21 = arith.mulf %19, %20 : vector<1x512xf32>
    %22 = vector.broadcast %21 : vector<1x512xf32> to vector<8x512xf32>
    %23 = arith.mulf %22, %9 : vector<8x512xf32>
    %24 = arith.addf %13, %23 : vector<8x512xf32>
    %cst_13 = arith.constant dense<0.000000e+00> : vector<8x512xf32>
    %25 = tpu.matmul %0, %24, %cst_13 {dimension_numbers = #tpu.dot_dimension_numbers<[1], [0], [0], [1], [0, 0, 1, 1], [], []>} : vector<8x8xf32>, vector<8x512xf32>, vector<8x512xf32> -> vector<8x512xf32>
    %26 = vector.broadcast %1 : vector<8x1xf32> to vector<8x512xf32>
    %27 = arith.addf %25, %26 : vector<8x512xf32>
    %28 = math.tanh %27 : vector<8x512xf32>
    %29 = arith.addf %24, %28 : vector<8x512xf32>
    %30 = arith.addf %29, %28 : vector<8x512xf32>
    %31 = arith.mulf %30, %9 : vector<8x512xf32>
    %cst_14 = arith.constant dense<0.000000e+00> : vector<512xf32>
    %32 = vector.multi_reduction <add>, %31, %cst_14 [0] : vector<8x512xf32> to vector<512xf32>
    %33 = vector.shape_cast %32 : vector<512xf32> to vector<1x512xf32>
    %34 = vector.broadcast %3 : f32 to vector<1x512xf32>
    %35 = arith.addf %11, %34 : vector<1x512xf32>
    %36 = arith.subf %7, %33 : vector<1x512xf32>
    %37 = tpu.reciprocal %35 {approx = true} : vector<1x512xf32> -> vector<1x512xf32>
    %38 = arith.mulf %36, %37 : vector<1x512xf32>
    %39 = vector.broadcast %38 : vector<1x512xf32> to vector<8x512xf32>
    %40 = arith.mulf %39, %9 : vector<8x512xf32>
    %41 = arith.addf %29, %40 : vector<8x512xf32>
    %cst_15 = arith.constant dense<0.000000e+00> : vector<8x512xf32>
    %42 = tpu.matmul %0, %41, %cst_15 {dimension_numbers = #tpu.dot_dimension_numbers<[1], [0], [0], [1], [0, 0, 1, 1], [], []>} : vector<8x8xf32>, vector<8x512xf32>, vector<8x512xf32> -> vector<8x512xf32>
    %43 = vector.broadcast %1 : vector<8x1xf32> to vector<8x512xf32>
    %44 = arith.addf %42, %43 : vector<8x512xf32>
    %45 = math.tanh %44 : vector<8x512xf32>
    %46 = arith.addf %41, %45 : vector<8x512xf32>
    %c0_16 = arith.constant 0 : index
    %c0_17 = arith.constant 0 : index
    %c0_18 = arith.constant 0 : index
    %47 = vector.load %arg8[%c0_16, %c0_17, %c0_18] : memref<1x8x1024xf32, #tpu.memory_space<vmem>>, vector<1x8x512xf32>
    %48 = vector.shape_cast %47 : vector<1x8x512xf32> to vector<8x512xf32>
    %49 = vector.shape_cast %46 : vector<8x512xf32> to vector<1x8x512xf32>
    tpu.vector_store %arg8[%c0_16, %c0_17, %c0_18], %49 {strides = array<i32>} : memref<1x8x1024xf32, #tpu.memory_space<vmem>>, vector<1x8x512xf32>,
    %50 = arith.addf %46, %45 : vector<8x512xf32>
    %51 = arith.mulf %50, %9 : vector<8x512xf32>
    %cst_19 = arith.constant dense<0.000000e+00> : vector<512xf32>
    %52 = vector.multi_reduction <add>, %51, %cst_19 [0] : vector<8x512xf32> to vector<512xf32>
    %53 = vector.shape_cast %52 : vector<512xf32> to vector<1x512xf32>
    %54 = vector.broadcast %4 : f32 to vector<1x512xf32>
    %55 = arith.addf %11, %54 : vector<1x512xf32>
    %56 = arith.subf %7, %53 : vector<1x512xf32>
    %57 = tpu.reciprocal %55 {approx = true} : vector<1x512xf32> -> vector<1x512xf32>
    %58 = arith.mulf %56, %57 : vector<1x512xf32>
    %59 = vector.broadcast %58 : vector<1x512xf32> to vector<8x512xf32>
    %60 = arith.mulf %59, %9 : vector<8x512xf32>
    %61 = arith.addf %46, %60 : vector<8x512xf32>
    %cst_20 = arith.constant dense<0.000000e+00> : vector<8x512xf32>
    %62 = tpu.matmul %0, %61, %cst_20 {dimension_numbers = #tpu.dot_dimension_numbers<[1], [0], [0], [1], [0, 0, 1, 1], [], []>} : vector<8x8xf32>, vector<8x512xf32>, vector<8x512xf32> -> vector<8x512xf32>
    %63 = vector.broadcast %1 : vector<8x1xf32> to vector<8x512xf32>
    %64 = arith.addf %62, %63 : vector<8x512xf32>
    %65 = math.tanh %64 : vector<8x512xf32>
    %66 = arith.addf %61, %65 : vector<8x512xf32>
    %c0_21 = arith.constant 0 : index
    %c0_22 = arith.constant 0 : index
    %c0_23 = arith.constant 0 : index
    %67 = vector.load %arg9[%c0_21, %c0_22, %c0_23] : memref<1x8x1024xf32, #tpu.memory_space<vmem>>, vector<1x8x512xf32>
    %68 = vector.shape_cast %67 : vector<1x8x512xf32> to vector<8x512xf32>
    %69 = vector.shape_cast %66 : vector<8x512xf32> to vector<1x8x512xf32>
    tpu.vector_store %arg9[%c0_21, %c0_22, %c0_23], %69 {strides = array<i32>} : memref<1x8x1024xf32, #tpu.memory_space<vmem>>, vector<1x8x512xf32>,
    %70 = arith.addf %66, %65 : vector<8x512xf32>
    %71 = arith.mulf %70, %9 : vector<8x512xf32>
    %cst_24 = arith.constant dense<0.000000e+00> : vector<512xf32>
    %72 = vector.multi_reduction <add>, %71, %cst_24 [0] : vector<8x512xf32> to vector<512xf32>
    %73 = vector.shape_cast %72 : vector<512xf32> to vector<1x512xf32>
    %74 = vector.broadcast %5 : f32 to vector<1x512xf32>
    %75 = arith.addf %11, %74 : vector<1x512xf32>
    %76 = arith.subf %7, %73 : vector<1x512xf32>
    %77 = tpu.reciprocal %75 {approx = true} : vector<1x512xf32> -> vector<1x512xf32>
    %78 = arith.mulf %76, %77 : vector<1x512xf32>
    %79 = vector.broadcast %78 : vector<1x512xf32> to vector<8x512xf32>
    %80 = arith.mulf %79, %9 : vector<8x512xf32>
    %81 = arith.addf %66, %80 : vector<8x512xf32>
    %cst_25 = arith.constant dense<0.000000e+00> : vector<8x512xf32>
    %82 = tpu.matmul %0, %81, %cst_25 {dimension_numbers = #tpu.dot_dimension_numbers<[1], [0], [0], [1], [0, 0, 1, 1], [], []>} : vector<8x8xf32>, vector<8x512xf32>, vector<8x512xf32> -> vector<8x512xf32>
    %83 = vector.broadcast %1 : vector<8x1xf32> to vector<8x512xf32>
    %84 = arith.addf %82, %83 : vector<8x512xf32>
    %85 = math.tanh %84 : vector<8x512xf32>
    %86 = arith.addf %81, %85 : vector<8x512xf32>
    %c0_26 = arith.constant 0 : index
    %c0_27 = arith.constant 0 : index
    %c0_28 = arith.constant 0 : index
    %87 = vector.load %arg10[%c0_26, %c0_27, %c0_28] : memref<1x8x1024xf32, #tpu.memory_space<vmem>>, vector<1x8x512xf32>
    %88 = vector.shape_cast %87 : vector<1x8x512xf32> to vector<8x512xf32>
    %89 = vector.shape_cast %86 : vector<8x512xf32> to vector<1x8x512xf32>
    tpu.vector_store %arg10[%c0_26, %c0_27, %c0_28], %89 {strides = array<i32>} : memref<1x8x1024xf32, #tpu.memory_space<vmem>>, vector<1x8x512xf32>,
    %c0_29 = arith.constant 0 : index
    %c0_30 = arith.constant 0 : index
    %c512 = arith.constant 512 : index
    %90 = vector.load %arg3[%c0_29, %c0_30, %c512] : memref<1x1x1024xf32, #tpu.memory_space<vmem>>, vector<1x1x512xf32>
    %91 = vector.shape_cast %90 : vector<1x1x512xf32> to vector<1x512xf32>
    %c0_31 = arith.constant 0 : index
    %c0_32 = arith.constant 0 : index
    %c512_33 = arith.constant 512 : index
    %92 = vector.load %arg4[%c0_31, %c0_32, %c512_33] : memref<1x8x1024xf32, #tpu.memory_space<vmem>>, vector<1x8x512xf32>
    %93 = vector.shape_cast %92 : vector<1x8x512xf32> to vector<8x512xf32>
    %c0_34 = arith.constant 0 : index
    %c0_35 = arith.constant 0 : index
    %c512_36 = arith.constant 512 : index
    %94 = vector.load %arg5[%c0_34, %c0_35, %c512_36] : memref<1x1x1024xf32, #tpu.memory_space<vmem>>, vector<1x1x512xf32>
    %95 = vector.shape_cast %94 : vector<1x1x512xf32> to vector<1x512xf32>
    %96 = vector.broadcast %91 : vector<1x512xf32> to vector<8x512xf32>
    %97 = arith.mulf %96, %93 : vector<8x512xf32>
    %98 = arith.mulf %97, %93 : vector<8x512xf32>
    %cst_37 = arith.constant dense<0.000000e+00> : vector<512xf32>
    %99 = vector.multi_reduction <add>, %98, %cst_37 [0] : vector<8x512xf32> to vector<512xf32>
    %100 = vector.shape_cast %99 : vector<512xf32> to vector<1x512xf32>
    %101 = vector.broadcast %2 : f32 to vector<1x512xf32>
    %102 = arith.addf %95, %101 : vector<1x512xf32>
    %103 = arith.subf %91, %100 : vector<1x512xf32>
    %104 = tpu.reciprocal %102 {approx = true} : vector<1x512xf32> -> vector<1x512xf32>
    %105 = arith.mulf %103, %104 : vector<1x512xf32>
    %106 = vector.broadcast %105 : vector<1x512xf32> to vector<8x512xf32>
    %107 = arith.mulf %106, %93 : vector<8x512xf32>
    %108 = arith.addf %97, %107 : vector<8x512xf32>
    %cst_38 = arith.constant dense<0.000000e+00> : vector<8x512xf32>
    %109 = tpu.matmul %0, %108, %cst_38 {dimension_numbers = #tpu.dot_dimension_numbers<[1], [0], [0], [1], [0, 0, 1, 1], [], []>} : vector<8x8xf32>, vector<8x512xf32>, vector<8x512xf32> -> vector<8x512xf32>
    %110 = vector.broadcast %1 : vector<8x1xf32> to vector<8x512xf32>
    %111 = arith.addf %109, %110 : vector<8x512xf32>
    %112 = math.tanh %111 : vector<8x512xf32>
    %113 = arith.addf %108, %112 : vector<8x512xf32>
    %114 = arith.addf %113, %112 : vector<8x512xf32>
    %115 = arith.mulf %114, %93 : vector<8x512xf32>
    %cst_39 = arith.constant dense<0.000000e+00> : vector<512xf32>
    %116 = vector.multi_reduction <add>, %115, %cst_39 [0] : vector<8x512xf32> to vector<512xf32>
    %117 = vector.shape_cast %116 : vector<512xf32> to vector<1x512xf32>
    %118 = vector.broadcast %3 : f32 to vector<1x512xf32>
    %119 = arith.addf %95, %118 : vector<1x512xf32>
    %120 = arith.subf %91, %117 : vector<1x512xf32>
    %121 = tpu.reciprocal %119 {approx = true} : vector<1x512xf32> -> vector<1x512xf32>
    %122 = arith.mulf %120, %121 : vector<1x512xf32>
    %123 = vector.broadcast %122 : vector<1x512xf32> to vector<8x512xf32>
    %124 = arith.mulf %123, %93 : vector<8x512xf32>
    %125 = arith.addf %113, %124 : vector<8x512xf32>
    %cst_40 = arith.constant dense<0.000000e+00> : vector<8x512xf32>
    %126 = tpu.matmul %0, %125, %cst_40 {dimension_numbers = #tpu.dot_dimension_numbers<[1], [0], [0], [1], [0, 0, 1, 1], [], []>} : vector<8x8xf32>, vector<8x512xf32>, vector<8x512xf32> -> vector<8x512xf32>
    %127 = vector.broadcast %1 : vector<8x1xf32> to vector<8x512xf32>
    %128 = arith.addf %126, %127 : vector<8x512xf32>
    %129 = math.tanh %128 : vector<8x512xf32>
    %130 = arith.addf %125, %129 : vector<8x512xf32>
    %c0_41 = arith.constant 0 : index
    %c0_42 = arith.constant 0 : index
    %c512_43 = arith.constant 512 : index
    %131 = vector.load %arg8[%c0_41, %c0_42, %c512_43] : memref<1x8x1024xf32, #tpu.memory_space<vmem>>, vector<1x8x512xf32>
    %132 = vector.shape_cast %131 : vector<1x8x512xf32> to vector<8x512xf32>
    %133 = vector.shape_cast %130 : vector<8x512xf32> to vector<1x8x512xf32>
    tpu.vector_store %arg8[%c0_41, %c0_42, %c512_43], %133 {strides = array<i32>} : memref<1x8x1024xf32, #tpu.memory_space<vmem>>, vector<1x8x512xf32>,
    %134 = arith.addf %130, %129 : vector<8x512xf32>
    %135 = arith.mulf %134, %93 : vector<8x512xf32>
    %cst_44 = arith.constant dense<0.000000e+00> : vector<512xf32>
    %136 = vector.multi_reduction <add>, %135, %cst_44 [0] : vector<8x512xf32> to vector<512xf32>
    %137 = vector.shape_cast %136 : vector<512xf32> to vector<1x512xf32>
    %138 = vector.broadcast %4 : f32 to vector<1x512xf32>
    %139 = arith.addf %95, %138 : vector<1x512xf32>
    %140 = arith.subf %91, %137 : vector<1x512xf32>
    %141 = tpu.reciprocal %139 {approx = true} : vector<1x512xf32> -> vector<1x512xf32>
    %142 = arith.mulf %140, %141 : vector<1x512xf32>
    %143 = vector.broadcast %142 : vector<1x512xf32> to vector<8x512xf32>
    %144 = arith.mulf %143, %93 : vector<8x512xf32>
    %145 = arith.addf %130, %144 : vector<8x512xf32>
    %cst_45 = arith.constant dense<0.000000e+00> : vector<8x512xf32>
    %146 = tpu.matmul %0, %145, %cst_45 {dimension_numbers = #tpu.dot_dimension_numbers<[1], [0], [0], [1], [0, 0, 1, 1], [], []>} : vector<8x8xf32>, vector<8x512xf32>, vector<8x512xf32> -> vector<8x512xf32>
    %147 = vector.broadcast %1 : vector<8x1xf32> to vector<8x512xf32>
    %148 = arith.addf %146, %147 : vector<8x512xf32>
    %149 = math.tanh %148 : vector<8x512xf32>
    %150 = arith.addf %145, %149 : vector<8x512xf32>
    %c0_46 = arith.constant 0 : index
    %c0_47 = arith.constant 0 : index
    %c512_48 = arith.constant 512 : index
    %151 = vector.load %arg9[%c0_46, %c0_47, %c512_48] : memref<1x8x1024xf32, #tpu.memory_space<vmem>>, vector<1x8x512xf32>
    %152 = vector.shape_cast %151 : vector<1x8x512xf32> to vector<8x512xf32>
    %153 = vector.shape_cast %150 : vector<8x512xf32> to vector<1x8x512xf32>
    tpu.vector_store %arg9[%c0_46, %c0_47, %c512_48], %153 {strides = array<i32>} : memref<1x8x1024xf32, #tpu.memory_space<vmem>>, vector<1x8x512xf32>,
    %154 = arith.addf %150, %149 : vector<8x512xf32>
    %155 = arith.mulf %154, %93 : vector<8x512xf32>
    %cst_49 = arith.constant dense<0.000000e+00> : vector<512xf32>
    %156 = vector.multi_reduction <add>, %155, %cst_49 [0] : vector<8x512xf32> to vector<512xf32>
    %157 = vector.shape_cast %156 : vector<512xf32> to vector<1x512xf32>
    %158 = vector.broadcast %5 : f32 to vector<1x512xf32>
    %159 = arith.addf %95, %158 : vector<1x512xf32>
    %160 = arith.subf %91, %157 : vector<1x512xf32>
    %161 = tpu.reciprocal %159 {approx = true} : vector<1x512xf32> -> vector<1x512xf32>
    %162 = arith.mulf %160, %161 : vector<1x512xf32>
    %163 = vector.broadcast %162 : vector<1x512xf32> to vector<8x512xf32>
    %164 = arith.mulf %163, %93 : vector<8x512xf32>
    %165 = arith.addf %150, %164 : vector<8x512xf32>
    %cst_50 = arith.constant dense<0.000000e+00> : vector<8x512xf32>
    %166 = tpu.matmul %0, %165, %cst_50 {dimension_numbers = #tpu.dot_dimension_numbers<[1], [0], [0], [1], [0, 0, 1, 1], [], []>} : vector<8x8xf32>, vector<8x512xf32>, vector<8x512xf32> -> vector<8x512xf32>
    %167 = vector.broadcast %1 : vector<8x1xf32> to vector<8x512xf32>
    %168 = arith.addf %166, %167 : vector<8x512xf32>
    %169 = math.tanh %168 : vector<8x512xf32>
    %170 = arith.addf %165, %169 : vector<8x512xf32>
    %c0_51 = arith.constant 0 : index
    %c0_52 = arith.constant 0 : index
    %c512_53 = arith.constant 512 : index
    %171 = vector.load %arg10[%c0_51, %c0_52, %c512_53] : memref<1x8x1024xf32, #tpu.memory_space<vmem>>, vector<1x8x512xf32>
    %172 = vector.shape_cast %171 : vector<1x8x512xf32> to vector<8x512xf32>
    %173 = vector.shape_cast %170 : vector<8x512xf32> to vector<1x8x512xf32>
    tpu.vector_store %arg10[%c0_51, %c0_52, %c512_53], %173 {strides = array<i32>} : memref<1x8x1024xf32, #tpu.memory_space<vmem>>, vector<1x8x512xf32>,
    return
  }
  func.func @transform_0(%arg0: i32, %arg1: i32) -> i32 {
    %c0_i32 = arith.constant 0 : i32
    %c0_i32_0 = arith.constant 0 : i32
    return %c0_i32 : i32
  }
  func.func @transform_1(%arg0: i32, %arg1: i32) -> (i32, i32, i32) {
    %c0_i32 = arith.constant 0 : i32
    %c0_i32_0 = arith.constant 0 : i32
    return %arg1, %c0_i32, %arg0 : i32, i32, i32
  }
  func.func @transform_2(%arg0: i32, %arg1: i32) -> (i32, i32, i32) {
    %c0_i32 = arith.constant 0 : i32
    %c0_i32_0 = arith.constant 0 : i32
    return %arg1, %c0_i32, %arg0 : i32, i32, i32
  }
  func.func @transform_3(%arg0: i32, %arg1: i32) -> (i32, i32, i32) {
    %c0_i32 = arith.constant 0 : i32
    %c0_i32_0 = arith.constant 0 : i32
    return %arg1, %c0_i32, %arg0 : i32, i32, i32
  }
  func.func @transform_4(%arg0: i32, %arg1: i32) -> (i32, i32) {
    %c0_i32 = arith.constant 0 : i32
    %c0_i32_0 = arith.constant 0 : i32
    %c0_i32_1 = arith.constant 0 : i32
    return %c0_i32, %c0_i32_0 : i32, i32
  }
  func.func @transform_5(%arg0: i32, %arg1: i32) -> (i32, i32) {
    %c0_i32 = arith.constant 0 : i32
    %c0_i32_0 = arith.constant 0 : i32
    %c0_i32_1 = arith.constant 0 : i32
    return %c0_i32, %c0_i32_0 : i32, i32
  }
  func.func @transform_6(%arg0: i32, %arg1: i32) -> (i32, i32, i32) {
    %c0_i32 = arith.constant 0 : i32
    %c0_i32_0 = arith.constant 0 : i32
    return %arg1, %c0_i32, %arg0 : i32, i32, i32
  }
  func.func @transform_7(%arg0: i32, %arg1: i32) -> (i32, i32, i32) {
    %c0_i32 = arith.constant 0 : i32
    %c0_i32_0 = arith.constant 0 : i32
    return %arg1, %c0_i32, %arg0 : i32, i32, i32
  }
  func.func @transform_8(%arg0: i32, %arg1: i32) -> (i32, i32, i32) {
    %c0_i32 = arith.constant 0 : i32
    %c0_i32_0 = arith.constant 0 : i32
    return %arg1, %c0_i32, %arg0 : i32, i32, i32
  }
}

</mosaic_0001>

<llo_original>
// kernel: tpu_custom_call.1
$region0: #{tpu_custom_call.1}
  #allocation0 [shape = 'u32[]', space=smem, size = 0x4, offset = 0x4, fixed_abs, tag = 'smem constant byte address 0x4 - core index']
  #allocation1 [shape = 'u32[144,128]{1,0:T(1,128)}', space=vmem, size = 0x12000, scoped, tag = 'internal scratch']
  %s0 = inlined_call_operand.vmem [shape: f32[4], index: 0, kind: input, shape index: {}]
  %s1 = inlined_call_operand.hbm [shape: f32[2,1,1024], index: 1, kind: input, shape index: {}]
  %s2 = inlined_call_operand.hbm [shape: f32[2,8,1024], index: 2, kind: input, shape index: {}]
  %s3 = inlined_call_operand.hbm [shape: f32[2,1,1024], index: 3, kind: input, shape index: {}]
  %s4 = inlined_call_operand.vmem [shape: f32[8,8], index: 4, kind: input, shape index: {}]
  %s5 = inlined_call_operand.vmem [shape: f32[8,1], index: 5, kind: input, shape index: {}]
  %s6 = inlined_call_operand.hbm [shape: f32[2,8,1024], index: 6, kind: output, shape index: {0}]
  %s7 = inlined_call_operand.hbm [shape: f32[2,8,1024], index: 7, kind: output, shape index: {1}]
  %s8 = inlined_call_operand.hbm [shape: f32[2,8,1024], index: 8, kind: output, shape index: {2}]
  %9 = xla_tuple %s6, %s7, %s8
  %s10 = sld [smem:[#allocation0]]
  $region89: #{tpu_custom_call.1} parent=0
    _
  %s12 = ssub.s32 1, %s10
  %s13 = scalar_select 0, %s12, %s10
  $region1: #{tpu_custom_call.1} parent=0
    #allocation2 [shape = 'u8[512]{0}', space=smem, size = 0x200, scoped, tag = 'input window, operand 0, single buffered']
    #allocation3 [shape = 's32[2]{0}', space=sflag, size = 0x8, scoped, tag = 'scoped memory for tpu_custom_call.1']
    #allocation4 [shape = 's32[2]{0}', space=sflag, size = 0x8, scoped, tag = 'scoped memory for tpu_custom_call.1']
    #allocation5 [shape = 's32[2]{0}', space=sflag, size = 0x8, scoped, tag = 'scoped memory for tpu_custom_call.1']
    #allocation6 [shape = 'u8[8192]{0}', space=vmem, size = 0x2000, scoped, tag = 'input window, operand 1']
    #allocation7 [shape = 'u8[65536]{0}', space=vmem, size = 0x10000, scoped, tag = 'input window, operand 2']
    #allocation8 [shape = 's32[2]{0}', space=sflag, size = 0x8, scoped, tag = 'scoped memory for tpu_custom_call.1']
    #allocation9 [shape = 'u8[8192]{0}', space=vmem, size = 0x2000, scoped, tag = 'input window, operand 3']
    #allocation10 [shape = 'u8[65536]{0}', space=vmem, size = 0x10000, scoped, tag = 'output window, operand 0']
    #allocation11 [shape = 'u8[65536]{0}', space=vmem, size = 0x10000, scoped, tag = 'output window, operand 1']
    #allocation12 [shape = 's32[2]{0}', space=sflag, size = 0x8, scoped, tag = 'scoped memory for tpu_custom_call.1']
    #allocation13 [shape = 'u8[65536]{0}', space=vmem, size = 0x10000, scoped, tag = 'output window, operand 2']
    %14 = vsyncpa [#allocation5], 0
    %15 = vsyncpa [#allocation3], 0
    %s16 = scalar_lea.sflag [#allocation3], 1
    %17 = vsyncpa %s16, 0
    %18 = vsyncpa [#allocation8], 0
    %s19 = scalar_lea.sflag [#allocation8], 1
    %20 = vsyncpa %s19, 0
    %21 = vsyncpa [#allocation4], 0
    %s22 = scalar_lea.sflag [#allocation4], 1
    %23 = vsyncpa %s22, 0
    %24 = vsyncpa [#allocation12], 0
    %s25 = scalar_lea.sflag [#allocation12], 1
    %26 = vsyncpa %s25, 0
    loop: start=0, step=1, limit=4
    $region2: #{tpu_custom_call.1} parent=1 // loop_pre_header
      _
    $region3: #{tpu_custom_call.1} parent=1 // loop_header
      %s28 = sphi 0, %s32
      %p29 = scmp.ge.s32.totalorder %s28, 4
      %s35 = sphi 0, %s47
      %s36 = sphi 0, %s43
      %s37 = sphi 0, %s35
      %s38 = sphi 0, %s36
      %s39 = sphi 0, %s37
      %s40 = sphi 0, %s38
      %s48 = sphi 0, %s48
      %s50 = sphi 0, %s48
      %s51 = sphi 0, %s50
      %s65 = sphi 0, %s51
      %s73 = sphi 0, %s75
      %s76 = sphi 0, %s73
      %s77 = sphi 0, %s76
      %s93 = sphi 0, %s77
      %s101 = sphi 0, %s103
      %s104 = sphi 0, %s101
      %s105 = sphi 0, %s104
      %s121 = sphi 0, %s105
      %s129 = sphi 0, %s131
      %s132 = sphi 0, %s129
      %s133 = sphi 0, %s132
      %s149 = sphi 0, %s133
      %s153 = sphi 0, %s153
      %s155 = sphi 0, %s153
      %s156 = sphi 0, %s155
      %s170 = sphi 0, %s156
      %s174 = sphi 0, %s174
      %s176 = sphi 0, %s174
      %s177 = sphi 0, %s176
      %s191 = sphi 0, %s177
      %s199 = sphi 0, %s201
      %s202 = sphi 0, %s199
      %s203 = sphi 0, %s202
      %s219 = sphi 0, %s203
      %s227 = sphi 0, %s229
      %s230 = sphi 0, %s227
      %s231 = sphi 0, %s230
      %s247 = sphi 0, %s231
      %s255 = sphi 0, %s257
      %s258 = sphi 0, %s255
      %s259 = sphi 0, %s258
      %s275 = sphi 0, %s259
    $region4: #{tpu_custom_call.1} parent=1 // loop_header_branch
      %31 = sbr.rel (%p29) target = $region8
    $region5: #{tpu_custom_call.1} parent=1 // loop_body
      %s33 = ssub.s32 %s28, 1
      %s34 = ssub.s32 %s28, 2
      %s41 = sadd.s32 1, %s36
      %p42 = scmp.ge.s32.totalorder %s41, 2
      %s43 = scalar_select %p42, 0, %s41
      %s44 = sadd.s32 1, %s35
      %s45 = scalar_select %p42, %s44, %s35
      %p46 = scmp.ge.s32.totalorder %s45, 1
      %s47 = scalar_select %p46, 0, %s45
      %s49 = sadd.s32 %s48, 1
      %p52 = scmp.eq.s32.totalorder %s28, 1
      %p53 = scmp.ne.s32.totalorder %s48, %s50
      %p54 = scmp.eq.s32.totalorder %s28, 0
      %p55 = por %p53, %p54
      %p56 = scmp.ne.s32.totalorder %s48, %s50
      %p57 = scmp.eq.s32.totalorder %s33, 1
      %p58 = por %p56, %p57
      %p59 = scmp.ne.s32.totalorder %s50, %s51
      %p60 = scmp.eq.s32.totalorder %s33, 0
      %p61 = por %p59, %p60
      %p62 = scmp.ne.s32.totalorder %s50, %s51
      %p63 = scmp.eq.s32.totalorder %s34, 1
      %p64 = por %p62, %p63
      %p66 = scmp.ne.s32.totalorder %s51, %s65
      %p67 = scmp.eq.s32.totalorder %s34, 0
      %p68 = por %p66, %p67
      %s69 = ssub.s32 %s36, %s43
      %s70 = ssub.s32 %s35, %s47
      %s71 = sor.u32 %s69, %s70
      %p72 = scmp.eq.s32.totalorder %s71, 0
      %s74 = sadd.s32 %s73, 1
      %s75 = scalar_select %p72, %s73, %s74
      %p78 = pneg %p72
      %p79 = scmp.eq.s32.totalorder %s28, 1
      %p80 = por %p78, %p79
      %p81 = scmp.ne.s32.totalorder %s73, %s76
      %p82 = scmp.eq.s32.totalorder %s28, 0
      %p83 = por %p81, %p82
      %p84 = scmp.ne.s32.totalorder %s73, %s76
      %p85 = scmp.eq.s32.totalorder %s33, 1
      %p86 = por %p84, %p85
      %p87 = scmp.ne.s32.totalorder %s76, %s77
      %p88 = scmp.eq.s32.totalorder %s33, 0
      %p89 = por %p87, %p88
      %p90 = scmp.ne.s32.totalorder %s76, %s77
      %p91 = scmp.eq.s32.totalorder %s34, 1
      %p92 = por %p90, %p91
      %p94 = scmp.ne.s32.totalorder %s77, %s93
      %p95 = scmp.eq.s32.totalorder %s34, 0
      %p96 = por %p94, %p95
      %s97 = ssub.s32 %s36, %s43
      %s98 = ssub.s32 %s35, %s47
      %s99 = sor.u32 %s97, %s98
      %p100 = scmp.eq.s32.totalorder %s99, 0
      %s102 = sadd.s32 %s101, 1
      %s103 = scalar_select %p100, %s101, %s102
      %p106 = pneg %p100
      %p107 = scmp.eq.s32.totalorder %s28, 1
      %p108 = por %p106, %p107
      %p109 = scmp.ne.s32.totalorder %s101, %s104
      %p110 = scmp.eq.s32.totalorder %s28, 0
      %p111 = por %p109, %p110
      %p112 = scmp.ne.s32.totalorder %s101, %s104
      %p113 = scmp.eq.s32.totalorder %s33, 1
      %p114 = por %p112, %p113
      %p115 = scmp.ne.s32.totalorder %s104, %s105
      %p116 = scmp.eq.s32.totalorder %s33, 0
      %p117 = por %p115, %p116
      %p118 = scmp.ne.s32.totalorder %s104, %s105
      %p119 = scmp.eq.s32.totalorder %s34, 1
      %p120 = por %p118, %p119
      %p122 = scmp.ne.s32.totalorder %s105, %s121
      %p123 = scmp.eq.s32.totalorder %s34, 0
      %p124 = por %p122, %p123
      %s125 = ssub.s32 %s36, %s43
      %s126 = ssub.s32 %s35, %s47
      %s127 = sor.u32 %s125, %s126
      %p128 = scmp.eq.s32.totalorder %s127, 0
      %s130 = sadd.s32 %s129, 1
      %s131 = scalar_select %p128, %s129, %s130
      %p134 = pneg %p128
      %p135 = scmp.eq.s32.totalorder %s28, 1
      %p136 = por %p134, %p135
      %p137 = scmp.ne.s32.totalorder %s129, %s132
      %p138 = scmp.eq.s32.totalorder %s28, 0
      %p139 = por %p137, %p138
      %p140 = scmp.ne.s32.totalorder %s129, %s132
      %p141 = scmp.eq.s32.totalorder %s33, 1
      %p142 = por %p140, %p141
      %p143 = scmp.ne.s32.totalorder %s132, %s133
      %p144 = scmp.eq.s32.totalorder %s33, 0
      %p145 = por %p143, %p144
      %p146 = scmp.ne.s32.totalorder %s132, %s133
      %p147 = scmp.eq.s32.totalorder %s34, 1
      %p148 = por %p146, %p147
      %p150 = scmp.ne.s32.totalorder %s133, %s149
      %p151 = scmp.eq.s32.totalorder %s34, 0
      %p152 = por %p150, %p151
      %s154 = sadd.s32 %s153, 1
      %p157 = scmp.eq.s32.totalorder %s28, 1
      %p158 = scmp.ne.s32.totalorder %s153, %s155
      %p159 = scmp.eq.s32.totalorder %s28, 0
      %p160 = por %p158, %p159
      %p161 = scmp.ne.s32.totalorder %s153, %s155
      %p162 = scmp.eq.s32.totalorder %s33, 1
      %p163 = por %p161, %p162
      %p164 = scmp.ne.s32.totalorder %s155, %s156
      %p165 = scmp.eq.s32.totalorder %s33, 0
      %p166 = por %p164, %p165
      %p167 = scmp.ne.s32.totalorder %s155, %s156
      %p168 = scmp.eq.s32.totalorder %s34, 1
      %p169 = por %p167, %p168
      %p171 = scmp.ne.s32.totalorder %s156, %s170
      %p172 = scmp.eq.s32.totalorder %s34, 0
      %p173 = por %p171, %p172
      %s175 = sadd.s32 %s174, 1
      %p178 = scmp.eq.s32.totalorder %s28, 1
      %p179 = scmp.ne.s32.totalorder %s174, %s176
      %p180 = scmp.eq.s32.totalorder %s28, 0
      %p181 = por %p179, %p180
      %p182 = scmp.ne.s32.totalorder %s174, %s176
      %p183 = scmp.eq.s32.totalorder %s33, 1
      %p184 = por %p182, %p183
      %p185 = scmp.ne.s32.totalorder %s176, %s177
      %p186 = scmp.eq.s32.totalorder %s33, 0
      %p187 = por %p185, %p186
      %p188 = scmp.ne.s32.totalorder %s176, %s177
      %p189 = scmp.eq.s32.totalorder %s34, 1
      %p190 = por %p188, %p189
      %p192 = scmp.ne.s32.totalorder %s177, %s191
      %p193 = scmp.eq.s32.totalorder %s34, 0
      %p194 = por %p192, %p193
      %s195 = ssub.s32 %s36, %s43
      %s196 = ssub.s32 %s35, %s47
      %s197 = sor.u32 %s195, %s196
      %p198 = scmp.eq.s32.totalorder %s197, 0
      %s200 = sadd.s32 %s199, 1
      %s201 = scalar_select %p198, %s199, %s200
      %p204 = pneg %p198
      %p205 = scmp.eq.s32.totalorder %s28, 1
      %p206 = por %p204, %p205
      %p207 = scmp.ne.s32.totalorder %s199, %s202
      %p208 = scmp.eq.s32.totalorder %s28, 0
      %p209 = por %p207, %p208
      %p210 = scmp.ne.s32.totalorder %s199, %s202
      %p211 = scmp.eq.s32.totalorder %s33, 1
      %p212 = por %p210, %p211
      %p213 = scmp.ne.s32.totalorder %s202, %s203
      %p214 = scmp.eq.s32.totalorder %s33, 0
      %p215 = por %p213, %p214
      %p216 = scmp.ne.s32.totalorder %s202, %s203
      %p217 = scmp.eq.s32.totalorder %s34, 1
      %p218 = por %p216, %p217
      %p220 = scmp.ne.s32.totalorder %s203, %s219
      %p221 = scmp.eq.s32.totalorder %s34, 0
      %p222 = por %p220, %p221
      %s223 = ssub.s32 %s36, %s43
      %s224 = ssub.s32 %s35, %s47
      %s225 = sor.u32 %s223, %s224
      %p226 = scmp.eq.s32.totalorder %s225, 0
      %s228 = sadd.s32 %s227, 1
      %s229 = scalar_select %p226, %s227, %s228
      %p232 = pneg %p226
      %p233 = scmp.eq.s32.totalorder %s28, 1
      %p234 = por %p232, %p233
      %p235 = scmp.ne.s32.totalorder %s227, %s230
      %p236 = scmp.eq.s32.totalorder %s28, 0
      %p237 = por %p235, %p236
      %p238 = scmp.ne.s32.totalorder %s227, %s230
      %p239 = scmp.eq.s32.totalorder %s33, 1
      %p240 = por %p238, %p239
      %p241 = scmp.ne.s32.totalorder %s230, %s231
      %p242 = scmp.eq.s32.totalorder %s33, 0
      %p243 = por %p241, %p242
      %p244 = scmp.ne.s32.totalorder %s230, %s231
      %p245 = scmp.eq.s32.totalorder %s34, 1
      %p246 = por %p244, %p245
      %p248 = scmp.ne.s32.totalorder %s231, %s247
      %p249 = scmp.eq.s32.totalorder %s34, 0
      %p250 = por %p248, %p249
      %s251 = ssub.s32 %s36, %s43
      %s252 = ssub.s32 %s35, %s47
      %s253 = sor.u32 %s251, %s252
      %p254 = scmp.eq.s32.totalorder %s253, 0
      %s256 = sadd.s32 %s255, 1
      %s257 = scalar_select %p254, %s255, %s256
      %p260 = pneg %p254
      %p261 = scmp.eq.s32.totalorder %s28, 1
      %p262 = por %p260, %p261
      %p263 = scmp.ne.s32.totalorder %s255, %s258
      %p264 = scmp.eq.s32.totalorder %s28, 0
      %p265 = por %p263, %p264
      %p266 = scmp.ne.s32.totalorder %s255, %s258
      %p267 = scmp.eq.s32.totalorder %s33, 1
      %p268 = por %p266, %p267
      %p269 = scmp.ne.s32.totalorder %s258, %s259
      %p270 = scmp.eq.s32.totalorder %s33, 0
      %p271 = por %p269, %p270
      %p272 = scmp.ne.s32.totalorder %s258, %s259
      %p273 = scmp.eq.s32.totalorder %s34, 1
      %p274 = por %p272, %p273
      %p276 = scmp.ne.s32.totalorder %s259, %s275
      %p277 = scmp.eq.s32.totalorder %s34, 0
      %p278 = por %p276, %p277
      %p279 = scmp.le.s32.totalorder 1, %s28
      %p280 = scmp.lt.s32.totalorder %s28, 3
      %p281 = pnand %p279, %p280
      %p282 = pneg %p281
      // Predicated region
      $region9: #{tpu_custom_call.1} parent=5 // pred_check
        _
      $region10: #{tpu_custom_call.1} parent=5 // pred_check_branch
        %284 = sbr.rel (%p281) target = $region12
      $region11: #{tpu_custom_call.1} parent=5 // pred_region
        %s285 = ssub.s32 %s28, 1
        // Predicated region
        $region13: #{tpu_custom_call.1} parent=11 // pred_check
          %p286 = pneg %p61
        $region14: #{tpu_custom_call.1} parent=11 // pred_check_branch
          %288 = sbr.rel (%p286) target = $region16
        $region15: #{tpu_custom_call.1} parent=11 // pred_region
          %s290 = ssub.s32 16, 16
          %291 = vsyncadd [#allocation5], %s290
          %s293 = sshll.u32 %s0, 4
          %s294 = int_to_ptr.vmem [resolvable:$true] %s293
          %296 = dma.vmem_to_smem %s294, 16, [#allocation2], [#allocation5]
        $region16: #{tpu_custom_call.1} parent=11 // pred_fallthru
          _
        // Predicated region
        $region17: #{tpu_custom_call.1} parent=11 // pred_check
          %p297 = pneg %p166
        $region18: #{tpu_custom_call.1} parent=11 // pred_check_branch
          %299 = sbr.rel (%p297) target = $region20
        $region19: #{tpu_custom_call.1} parent=11 // pred_region
          _
        $region20: #{tpu_custom_call.1} parent=11 // pred_fallthru
          _
        // Predicated region
        $region21: #{tpu_custom_call.1} parent=11 // pred_check
          %p300 = pneg %p187
        $region22: #{tpu_custom_call.1} parent=11 // pred_check_branch
          %302 = sbr.rel (%p300) target = $region24
        $region23: #{tpu_custom_call.1} parent=11 // pred_region
          _
        $region24: #{tpu_custom_call.1} parent=11 // pred_fallthru
          _
      $region12: #{tpu_custom_call.1} parent=5 // pred_fallthru
        _
      %p303 = scmp.lt.s32.totalorder %s28, 2
      // Predicated region
      $region25: #{tpu_custom_call.1} parent=5 // pred_check
        %p304 = pneg %p303
      $region26: #{tpu_custom_call.1} parent=5 // pred_check_branch
        %306 = sbr.rel (%p304) target = $region28
      $region27: #{tpu_custom_call.1} parent=5 // pred_region
        // Predicated region
        $region29: #{tpu_custom_call.1} parent=27 // pred_check
          %p307 = pneg %p83
        $region30: #{tpu_custom_call.1} parent=27 // pred_check_branch
          %309 = sbr.rel (%p307) target = $region32
        $region31: #{tpu_custom_call.1} parent=27 // pred_region
          %s310 = sand.u32 %s73, 1
          %s311 = scalar_lea.sflag [#allocation3], %s310
          %s312 = sand.u32 %s73, 1
          %s313 = smul.addr %s312, 8
          %s314 = scalar_lea.vmem [#allocation6], %s313
          %s315 = smul.u32 8, %s35
          %s317 = ssub.s32 128, 128
          %318 = vsyncadd %s311, %s317
          %s319 = smul.addr %s36, 8
          %s320 = sadd.s32 %s315, %s319
          %s321 = smul.addr %s320, 16
          %s322 = scalar_lea.hbm %s1, %s321
          %s324 = sshll.u32 %s314, 4
          %s325 = int_to_ptr.vmem [resolvable:$true] %s324
          %327 = dma.hbm_to_vmem [thread:$0]  %s322, 128, %s325, %s311
        $region32: #{tpu_custom_call.1} parent=27 // pred_fallthru
          _
        // Predicated region
        $region33: #{tpu_custom_call.1} parent=27 // pred_check
          %p328 = pneg %p111
        $region34: #{tpu_custom_call.1} parent=27 // pred_check_branch
          %330 = sbr.rel (%p328) target = $region36
        $region35: #{tpu_custom_call.1} parent=27 // pred_region
          %s331 = sand.u32 %s28, 1
          %s332 = scalar_lea.sflag [#allocation8], %s331
          %s333 = sand.u32 %s101, 1
          %s334 = smul.addr %s333, 64
          %s335 = scalar_lea.vmem [#allocation7], %s334
          %s336 = smul.u32 8, %s35
          %s338 = ssub.s32 1024, 1024
          %339 = vsyncadd %s332, %s338
          %s340 = smul.addr %s36, 8
          %s341 = sadd.s32 %s336, %s340
          %s342 = smul.addr %s341, 128
          %s343 = scalar_lea.hbm %s2, %s342
          %s345 = sshll.u32 %s335, 4
          %s346 = int_to_ptr.vmem [resolvable:$true] %s345
          %348 = dma.hbm_to_vmem [thread:$0]  %s343, 1024, %s346, %s332
        $region36: #{tpu_custom_call.1} parent=27 // pred_fallthru
          _
        // Predicated region
        $region37: #{tpu_custom_call.1} parent=27 // pred_check
          %p349 = pneg %p139
        $region38: #{tpu_custom_call.1} parent=27 // pred_check_branch
          %351 = sbr.rel (%p349) target = $region40
        $region39: #{tpu_custom_call.1} parent=27 // pred_region
          %s352 = sand.u32 %s28, 1
          %s353 = scalar_lea.sflag [#allocation8], %s352
          %s354 = sand.u32 %s129, 1
          %s355 = smul.addr %s354, 8
          %s356 = scalar_lea.vmem [#allocation9], %s355
          %s357 = smul.u32 8, %s35
          %s359 = ssub.s32 128, 128
          %360 = vsyncadd %s353, %s359
          %s361 = smul.addr %s36, 8
          %s362 = sadd.s32 %s357, %s361
          %s363 = smul.addr %s362, 16
          %s364 = scalar_lea.hbm %s3, %s363
          %s366 = sshll.u32 %s356, 4
          %s367 = int_to_ptr.vmem [resolvable:$true] %s366
          %369 = dma.hbm_to_vmem [thread:$0]  %s364, 128, %s367, %s353
        $region40: #{tpu_custom_call.1} parent=27 // pred_fallthru
          _
      $region28: #{tpu_custom_call.1} parent=5 // pred_fallthru
        _
      %p370 = scmp.le.s32.totalorder 1, %s28
      %p371 = scmp.lt.s32.totalorder %s28, 3
      %p372 = pnand %p370, %p371
      %p373 = pneg %p372
      // Predicated region
      $region41: #{tpu_custom_call.1} parent=5 // pred_check
        _
      $region42: #{tpu_custom_call.1} parent=5 // pred_check_branch
        %375 = sbr.rel (%p372) target = $region44
      $region43: #{tpu_custom_call.1} parent=5 // pred_region
        %s376 = ssub.s32 %s28, 1
        // Predicated region
        $region45: #{tpu_custom_call.1} parent=43 // pred_check
          %p377 = pneg %p61
        $region46: #{tpu_custom_call.1} parent=43 // pred_check_branch
          %379 = sbr.rel (%p377) target = $region48
        $region47: #{tpu_custom_call.1} parent=43 // pred_region
          %380 = dma.done [#allocation5], 16
        $region48: #{tpu_custom_call.1} parent=43 // pred_fallthru
          _
        %s381 = sand.u32 %s76, 1
        %s382 = scalar_lea.sflag [#allocation3], %s381
        %s383 = sand.u32 %s76, 1
        %s384 = smul.addr %s383, 8
        %s385 = scalar_lea.vmem [#allocation6], %s384
        // Predicated region
        $region49: #{tpu_custom_call.1} parent=43 // pred_check
          %p386 = pneg %p89
        $region50: #{tpu_custom_call.1} parent=43 // pred_check_branch
          %388 = sbr.rel (%p386) target = $region52
        $region51: #{tpu_custom_call.1} parent=43 // pred_region
          %389 = dma.done %s382, 128
        $region52: #{tpu_custom_call.1} parent=43 // pred_fallthru
          _
        %s390 = sand.u32 %s33, 1
        %s391 = scalar_lea.sflag [#allocation8], %s390
        %s392 = sand.u32 %s104, 1
        %s393 = smul.addr %s392, 64
        %s394 = scalar_lea.vmem [#allocation7], %s393
        // Predicated region
        $region53: #{tpu_custom_call.1} parent=43 // pred_check
          %p395 = pneg %p117
        $region54: #{tpu_custom_call.1} parent=43 // pred_check_branch
          %397 = sbr.rel (%p395) target = $region56
        $region55: #{tpu_custom_call.1} parent=43 // pred_region
          %398 = dma.done %s391, 1024
        $region56: #{tpu_custom_call.1} parent=43 // pred_fallthru
          _
        %s399 = sand.u32 %s33, 1
        %s400 = scalar_lea.sflag [#allocation8], %s399
        %s401 = sand.u32 %s132, 1
        %s402 = smul.addr %s401, 8
        %s403 = scalar_lea.vmem [#allocation9], %s402
        // Predicated region
        $region57: #{tpu_custom_call.1} parent=43 // pred_check
          %p404 = pneg %p145
        $region58: #{tpu_custom_call.1} parent=43 // pred_check_branch
          %406 = sbr.rel (%p404) target = $region60
        $region59: #{tpu_custom_call.1} parent=43 // pred_region
          %407 = dma.done %s400, 128
        $region60: #{tpu_custom_call.1} parent=43 // pred_fallthru
          _
        %408 = sfence
        %p409 = pneg %p61
        %p410 = pneg %p58
        %s411 = sand.u32 %s76, 1
        %s412 = scalar_lea.sflag [#allocation3], %s411
        %s413 = sand.u32 %s76, 1
        %s414 = smul.addr %s413, 8
        %s415 = scalar_lea.vmem [#allocation6], %s414
        %p416 = pneg %p89
        %p417 = pneg %p86
        %s418 = sand.u32 %s33, 1
        %s419 = scalar_lea.sflag [#allocation8], %s418
        %s420 = sand.u32 %s104, 1
        %s421 = smul.addr %s420, 64
        %s422 = scalar_lea.vmem [#allocation7], %s421
        %p423 = pneg %p117
        %p424 = pneg %p114
        %s425 = sand.u32 %s33, 1
        %s426 = scalar_lea.sflag [#allocation8], %s425
        %s427 = sand.u32 %s132, 1
        %s428 = smul.addr %s427, 8
        %s429 = scalar_lea.vmem [#allocation9], %s428
        %p430 = pneg %p145
        %p431 = pneg %p142
        %p432 = pneg %p166
        %p433 = pneg %p163
        %p434 = pneg %p187
        %p435 = pneg %p184
        %p436 = pneg %p215
        %p437 = pneg %p212
        %s438 = sand.u32 %s202, 1
        %s439 = scalar_lea.sflag [#allocation4], %s438
        %s440 = sand.u32 %s202, 1
        %s441 = smul.addr %s440, 64
        %s442 = scalar_lea.vmem [#allocation10], %s441
        %p443 = pneg %p243
        %p444 = pneg %p240
        %s445 = sand.u32 %s33, 1
        %s446 = scalar_lea.sflag [#allocation12], %s445
        %s447 = sand.u32 %s230, 1
        %s448 = smul.addr %s447, 64
        %s449 = scalar_lea.vmem [#allocation11], %s448
        %p450 = pneg %p271
        %p451 = pneg %p268
        %s452 = sand.u32 %s33, 1
        %s453 = scalar_lea.sflag [#allocation12], %s452
        %s454 = sand.u32 %s258, 1
        %s455 = smul.addr %s454, 64
        %s456 = scalar_lea.vmem [#allocation13], %s455
        %s457 = smul.u32 8, %s37
        %s458 = smul.u32 8, %s37
        %s459 = smul.u32 8, %s37
        %s460 = smul.u32 8, %s37
        %s461 = smul.u32 8, %s37
        %s462 = smul.u32 8, %s37
        %v463 = vld [vmem:[%s4] sm:$0xff]
        %v464 = vld [vmem:[%s5] sm:$0xff]
        %s465 = sld [smem:[#allocation2]]
        %s466 = sld [smem:[#allocation2 + $0x1]]
        %s467 = sld [smem:[#allocation2 + $0x2]]
        %s468 = sld [smem:[#allocation2 + $0x3]]
        %v469 = vld [vmem:[%s385] sm:$0xf]
        %v470 = vld [vmem:[%s394] sm:$0xff]
        %v471 = vld [vmem:[%s394 + $0x8] sm:$0xff]
        %v472 = vld [vmem:[%s394 + $0x10] sm:$0xff]
        %v473 = vld [vmem:[%s394 + $0x18] sm:$0xff]
        %v474 = vld [vmem:[%s403] sm:$0xf]
        %v476 = vlaneseq
        %v477 = vshrl.u32 %v476, 7
        %v478 = vsub.s32 0, %v477
        %v479 = vrot.slane %v469, %v478
        %v480 = vlaneseq
        %v481 = vshrl.u32 %v480, 7
        %v482 = vsub.s32 1, %v481
        %v483 = vrot.slane %v469, %v482
        %v484 = vlaneseq
        %v485 = vshrl.u32 %v484, 7
        %v486 = vsub.s32 2, %v485
        %v487 = vrot.slane %v469, %v486
        %v488 = vlaneseq
        %v489 = vshrl.u32 %v488, 7
        %v490 = vsub.s32 3, %v489
        %v491 = vrot.slane %v469, %v490
        %v496 = vmul.f32 %v479, %v470
        %v497 = vmul.f32 %v483, %v471
        %v498 = vmul.f32 %v487, %v472
        %v499 = vmul.f32 %v491, %v473
        %v500 = vmul.f32 %v496, %v470
        %v501 = vmul.f32 %v497, %v471
        %v502 = vmul.f32 %v498, %v472
        %v503 = vmul.f32 %v499, %v473
        %v504 = vrot.slane %v500, 4
        %v505 = vadd.f32 %v500, %v504
        %v506 = vrot.slane %v505, 2
        %v507 = vadd.f32 %v505, %v506
        %v508 = vrot.slane %v507, 1
        %v509 = vadd.f32 %v507, %v508
        %v510 = vrot.slane %v501, 4
        %v511 = vadd.f32 %v501, %v510
        %v512 = vrot.slane %v511, 2
        %v513 = vadd.f32 %v511, %v512
        %v514 = vrot.slane %v513, 1
        %v515 = vadd.f32 %v513, %v514
        %v516 = vrot.slane %v502, 4
        %v517 = vadd.f32 %v502, %v516
        %v518 = vrot.slane %v517, 2
        %v519 = vadd.f32 %v517, %v518
        %v520 = vrot.slane %v519, 1
        %v521 = vadd.f32 %v519, %v520
        %v522 = vrot.slane %v503, 4
        %v523 = vadd.f32 %v503, %v522
        %v524 = vrot.slane %v523, 2
        %v525 = vadd.f32 %v523, %v524
        %v526 = vrot.slane %v525, 1
        %v527 = vadd.f32 %v525, %v526
        %v528 = vstv %s465
        %v529 = vadd.f32 %v474, %v528
        %v534 = vcombine.low %v509, %v515
        %v535 = vcombine.low %v521, %v527
        %v537 = vunpack.c.l.s4 1966171168
        %v538 = vunpack.c.0.s8 %v537
        %v539 = vlaneseq
        %v540 = vshrl.u32 %v539, 7
        %v541 = vsub.s32 %v538, %v540
        %v542 = vrot.slane %v534, %v541
        %v544 = vunpack.c.l.s4 1966171168
        %v545 = vunpack.c.0.s8 %v544
        %v546 = vlaneseq
        %v547 = vshrl.u32 %v546, 7
        %v548 = vsub.s32 %v545, %v547
        %v549 = vrot.slane %v535, %v548
        %v550 = vcombine.low %v542, %v549
        %v552 = vunpack.c.l.s4 1966171168
        %v553 = vunpack.c.0.s8 %v552
        %v554 = vlaneseq
        %v555 = vshrl.u32 %v554, 7
        %v556 = vsub.s32 %v553, %v555
        %v557 = vrot.slane %v550, %v556
        %v559 = vsub.f32 %v469, %v557
        %v560 = vrcp.pop %v529
        %v561 = vmul.f32 %v559, %v560
        %v563 = vlaneseq
        %v564 = vshrl.u32 %v563, 7
        %v565 = vsub.s32 0, %v564
        %v566 = vrot.slane %v561, %v565
        %v567 = vlaneseq
        %v568 = vshrl.u32 %v567, 7
        %v569 = vsub.s32 1, %v568
        %v570 = vrot.slane %v561, %v569
        %v571 = vlaneseq
        %v572 = vshrl.u32 %v571, 7
        %v573 = vsub.s32 2, %v572
        %v574 = vrot.slane %v561, %v573
        %v575 = vlaneseq
        %v576 = vshrl.u32 %v575, 7
        %v577 = vsub.s32 3, %v576
        %v578 = vrot.slane %v561, %v577
        %v583 = vmul.f32 %v566, %v470
        %v584 = vmul.f32 %v570, %v471
        %v585 = vmul.f32 %v574, %v472
        %v586 = vmul.f32 %v578, %v473
        %v587 = vadd.f32 %v496, %v583
        %v588 = vadd.f32 %v497, %v584
        %v589 = vadd.f32 %v498, %v585
        %v590 = vadd.f32 %v499, %v586
        %592 = vset.pattern.permute.xlu0 0
        %593 = vperm.xlu0 %592, %v464
        %v594 = vpop.permute.xlu0 %593
        %vm596 = vcmask 64512
        %v598 = vsel %vm596, %v463, 0
        %600 = vmatprep.subr.mxu0 0.0
        %601 = vmatpush1.msra.mxu0 0.0
        %602 = vmatprep.subr.mxu0 0.0
        %603 = vmatpush1.msra.mxu0 0.0
        %604 = vmatprep.subr.mxu0 0.0
        %605 = vmatpush1.msra.mxu0 0.0
        %606 = vmatprep.subr.mxu0 0.0
        %607 = vmatpush1.msra.mxu0 0.0
        %608 = vmatprep.subr.mxu0 0.0
        %609 = vmatpush1.msra.mxu0 0.0
        %610 = vmatprep.subr.mxu0 0.0
        %611 = vmatpush1.msra.mxu0 0.0
        %612 = vmatprep.subr.mxu0 0.0
        %613 = vmatpush1.msra.mxu0 0.0
        %614 = vmatprep.subr.mxu0 0.0
        %615 = vmatpush1.msra.mxu0 0.0
        %616 = vmatprep.subr.mxu0 0.0
        %617 = vmatpush1.msra.mxu0 0.0
        %618 = vmatprep.subr.mxu0 0.0
        %619 = vmatpush1.msra.mxu0 0.0
        %620 = vmatprep.subr.mxu0 0.0
        %621 = vmatpush1.msra.mxu0 0.0
        %622 = vmatprep.subr.mxu0 0.0
        %623 = vmatpush1.msra.mxu0 0.0
        %624 = vmatprep.subr.mxu0 0.0
        %625 = vmatpush1.msra.mxu0 0.0
        %626 = vmatprep.subr.mxu0 0.0
        %627 = vmatpush1.msra.mxu0 0.0
        %628 = vmatprep.subr.mxu0 0.0
        %629 = vmatpush1.msra.mxu0 0.0
        %630 = vmatprep.subr.mxu0 %v588
        %631 = vmatpush1.msra.mxu0 %v587
        %632 = vmatprep.subr.mxu0 0.0
        %633 = vmatpush2.msra.mxu0 0.0
        %634 = vmatprep.subr.mxu0 0.0
        %635 = vmatpush2.msra.mxu0 0.0
        %636 = vmatprep.subr.mxu0 0.0
        %637 = vmatpush2.msra.mxu0 0.0
        %638 = vmatprep.subr.mxu0 0.0
        %639 = vmatpush2.msra.mxu0 0.0
        %640 = vmatprep.subr.mxu0 0.0
        %641 = vmatpush2.msra.mxu0 0.0
        %642 = vmatprep.subr.mxu0 0.0
        %643 = vmatpush2.msra.mxu0 0.0
        %644 = vmatprep.subr.mxu0 0.0
        %645 = vmatpush2.msra.mxu0 0.0
        %646 = vmatprep.subr.mxu0 0.0
        %647 = vmatpush2.msra.mxu0 0.0
        %648 = vmatprep.subr.mxu0 0.0
        %649 = vmatpush2.msra.mxu0 0.0
        %650 = vmatprep.subr.mxu0 0.0
        %651 = vmatpush2.msra.mxu0 0.0
        %652 = vmatprep.subr.mxu0 0.0
        %653 = vmatpush2.msra.mxu0 0.0
        %654 = vmatprep.subr.mxu0 0.0
        %655 = vmatpush2.msra.mxu0 0.0
        %656 = vmatprep.subr.mxu0 0.0
        %657 = vmatpush2.msra.mxu0 0.0
        %658 = vmatprep.subr.mxu0 0.0
        %659 = vmatpush2.msra.mxu0 0.0
        %660 = vmatprep.subr.mxu0 0.0
        %661 = vmatpush2.msra.mxu0 0.0
        %662 = vmatprep.subr.mxu0 0.0
        %663 = vmatpush2.msra.mxu0 0.0
        %664 = vmatprep.mubr.f32.mxu0 0.0
        %665 = vmatmul.mubr.f32.gmra.mxu0 %v598
        %v666 = vpop.f32.mrf.mxu0
        %v667 = vadd.f32 %v594, %v666
        %v668 = vpop.f32.mrf.mxu0
        %v669 = vadd.f32 %v594, %v668
        %670 = vdwg.mxu0
        %671 = vmatprep.subr.mxu0 0.0
        %672 = vmatpush1.msra.mxu0 0.0
        %673 = vmatprep.subr.mxu0 0.0
        %674 = vmatpush1.msra.mxu0 0.0
        %675 = vmatprep.subr.mxu0 0.0
        %676 = vmatpush1.msra.mxu0 0.0
        %677 = vmatprep.subr.mxu0 0.0
        %678 = vmatpush1.msra.mxu0 0.0
        %679 = vmatprep.subr.mxu0 0.0
        %680 = vmatpush1.msra.mxu0 0.0
        %681 = vmatprep.subr.mxu0 0.0
        %682 = vmatpush1.msra.mxu0 0.0
        %683 = vmatprep.subr.mxu0 0.0
        %684 = vmatpush1.msra.mxu0 0.0
        %685 = vmatprep.subr.mxu0 0.0
        %686 = vmatpush1.msra.mxu0 0.0
        %687 = vmatprep.subr.mxu0 0.0
        %688 = vmatpush1.msra.mxu0 0.0
        %689 = vmatprep.subr.mxu0 0.0
        %690 = vmatpush1.msra.mxu0 0.0
        %691 = vmatprep.subr.mxu0 0.0
        %692 = vmatpush1.msra.mxu0 0.0
        %693 = vmatprep.subr.mxu0 0.0
        %694 = vmatpush1.msra.mxu0 0.0
        %695 = vmatprep.subr.mxu0 0.0
        %696 = vmatpush1.msra.mxu0 0.0
        %697 = vmatprep.subr.mxu0 0.0
        %698 = vmatpush1.msra.mxu0 0.0
        %699 = vmatprep.subr.mxu0 0.0
        %700 = vmatpush1.msra.mxu0 0.0
        %701 = vmatprep.subr.mxu0 %v590
        %702 = vmatpush1.msra.mxu0 %v589
        %703 = vmatprep.subr.mxu0 0.0
        %704 = vmatpush2.msra.mxu0 0.0
        %705 = vmatprep.subr.mxu0 0.0
        %706 = vmatpush2.msra.mxu0 0.0
        %707 = vmatprep.subr.mxu0 0.0
        %708 = vmatpush2.msra.mxu0 0.0
        %709 = vmatprep.subr.mxu0 0.0
        %710 = vmatpush2.msra.mxu0 0.0
        %711 = vmatprep.subr.mxu0 0.0
        %712 = vmatpush2.msra.mxu0 0.0
        %713 = vmatprep.subr.mxu0 0.0
        %714 = vmatpush2.msra.mxu0 0.0
        %715 = vmatprep.subr.mxu0 0.0
        %716 = vmatpush2.msra.mxu0 0.0
        %717 = vmatprep.subr.mxu0 0.0
        %718 = vmatpush2.msra.mxu0 0.0
        %719 = vmatprep.subr.mxu0 0.0
        %720 = vmatpush2.msra.mxu0 0.0
        %721 = vmatprep.subr.mxu0 0.0
        %722 = vmatpush2.msra.mxu0 0.0
        %723 = vmatprep.subr.mxu0 0.0
        %724 = vmatpush2.msra.mxu0 0.0
        %725 = vmatprep.subr.mxu0 0.0
        %726 = vmatpush2.msra.mxu0 0.0
        %727 = vmatprep.subr.mxu0 0.0
        %728 = vmatpush2.msra.mxu0 0.0
        %729 = vmatprep.subr.mxu0 0.0
        %730 = vmatpush2.msra.mxu0 0.0
        %731 = vmatprep.subr.mxu0 0.0
        %732 = vmatpush2.msra.mxu0 0.0
        %733 = vmatprep.subr.mxu0 0.0
        %734 = vmatpush2.msra.mxu0 0.0
        %735 = vmatprep.mubr.f32.mxu0 0.0
        %736 = vmatmul.mubr.f32.gmra.mxu0 %v598
        %v737 = vpop.f32.mrf.mxu0
        %v738 = vadd.f32 %v594, %v737
        %v739 = vpop.f32.mrf.mxu0
        %v740 = vadd.f32 %v594, %v739
        %741 = vdwg.mxu0
        %v742 = vtanh.pop %v667
        %v743 = vtanh.pop %v669
        %v744 = vtanh.pop %v738
        %v745 = vtanh.pop %v740
        %v746 = vadd.f32 %v587, %v742
        %v747 = vadd.f32 %v588, %v743
        %v748 = vadd.f32 %v589, %v744
        %v749 = vadd.f32 %v590, %v745
        %v750 = vadd.f32 %v746, %v742
        %v751 = vadd.f32 %v747, %v743
        %v752 = vadd.f32 %v748, %v744
        %v753 = vadd.f32 %v749, %v745
        %v754 = vmul.f32 %v750, %v470
        %v755 = vmul.f32 %v751, %v471
        %v756 = vmul.f32 %v752, %v472
        %v757 = vmul.f32 %v753, %v473
        %v758 = vrot.slane %v754, 4
        %v759 = vadd.f32 %v754, %v758
        %v760 = vrot.slane %v759, 2
        %v761 = vadd.f32 %v759, %v760
        %v762 = vrot.slane %v761, 1
        %v763 = vadd.f32 %v761, %v762
        %v764 = vrot.slane %v755, 4
        %v765 = vadd.f32 %v755, %v764
        %v766 = vrot.slane %v765, 2
        %v767 = vadd.f32 %v765, %v766
        %v768 = vrot.slane %v767, 1
        %v769 = vadd.f32 %v767, %v768
        %v770 = vrot.slane %v756, 4
        %v771 = vadd.f32 %v756, %v770
        %v772 = vrot.slane %v771, 2
        %v773 = vadd.f32 %v771, %v772
        %v774 = vrot.slane %v773, 1
        %v775 = vadd.f32 %v773, %v774
        %v776 = vrot.slane %v757, 4
        %v777 = vadd.f32 %v757, %v776
        %v778 = vrot.slane %v777, 2
        %v779 = vadd.f32 %v777, %v778
        %v780 = vrot.slane %v779, 1
        %v781 = vadd.f32 %v779, %v780
        %v782 = vstv %s466
        %v783 = vadd.f32 %v474, %v782
        %v788 = vcombine.low %v763, %v769
        %v789 = vcombine.low %v775, %v781
        %v791 = vunpack.c.l.s4 1966171168
        %v792 = vunpack.c.0.s8 %v791
        %v793 = vlaneseq
        %v794 = vshrl.u32 %v793, 7
        %v795 = vsub.s32 %v792, %v794
        %v796 = vrot.slane %v788, %v795
        %v798 = vunpack.c.l.s4 1966171168
        %v799 = vunpack.c.0.s8 %v798
        %v800 = vlaneseq
        %v801 = vshrl.u32 %v800, 7
        %v802 = vsub.s32 %v799, %v801
        %v803 = vrot.slane %v789, %v802
        %v804 = vcombine.low %v796, %v803
        %v806 = vunpack.c.l.s4 1966171168
        %v807 = vunpack.c.0.s8 %v806
        %v808 = vlaneseq
        %v809 = vshrl.u32 %v808, 7
        %v810 = vsub.s32 %v807, %v809
        %v811 = vrot.slane %v804, %v810
        %v813 = vsub.f32 %v469, %v811
        %v814 = vrcp.pop %v783
        %v815 = vmul.f32 %v813, %v814
        %v817 = vlaneseq
        %v818 = vshrl.u32 %v817, 7
        %v819 = vsub.s32 0, %v818
        %v820 = vrot.slane %v815, %v819
        %v821 = vlaneseq
        %v822 = vshrl.u32 %v821, 7
        %v823 = vsub.s32 1, %v822
        %v824 = vrot.slane %v815, %v823
        %v825 = vlaneseq
        %v826 = vshrl.u32 %v825, 7
        %v827 = vsub.s32 2, %v826
        %v828 = vrot.slane %v815, %v827
        %v829 = vlaneseq
        %v830 = vshrl.u32 %v829, 7
        %v831 = vsub.s32 3, %v830
        %v832 = vrot.slane %v815, %v831
        %v837 = vmul.f32 %v820, %v470
        %v838 = vmul.f32 %v824, %v471
        %v839 = vmul.f32 %v828, %v472
        %v840 = vmul.f32 %v832, %v473
        %v841 = vadd.f32 %v746, %v837
        %v842 = vadd.f32 %v747, %v838
        %v843 = vadd.f32 %v748, %v839
        %v844 = vadd.f32 %v749, %v840
        %845 = vmatprep.subr.mxu0 0.0
        %846 = vmatpush1.msra.mxu0 0.0
        %847 = vmatprep.subr.mxu0 0.0
        %848 = vmatpush1.msra.mxu0 0.0
        %849 = vmatprep.subr.mxu0 0.0
        %850 = vmatpush1.msra.mxu0 0.0
        %851 = vmatprep.subr.mxu0 0.0
        %852 = vmatpush1.msra.mxu0 0.0
        %853 = vmatprep.subr.mxu0 0.0
        %854 = vmatpush1.msra.mxu0 0.0
        %855 = vmatprep.subr.mxu0 0.0
        %856 = vmatpush1.msra.mxu0 0.0
        %857 = vmatprep.subr.mxu0 0.0
        %858 = vmatpush1.msra.mxu0 0.0
        %859 = vmatprep.subr.mxu0 0.0
        %860 = vmatpush1.msra.mxu0 0.0
        %861 = vmatprep.subr.mxu0 0.0
        %862 = vmatpush1.msra.mxu0 0.0
        %863 = vmatprep.subr.mxu0 0.0
        %864 = vmatpush1.msra.mxu0 0.0
        %865 = vmatprep.subr.mxu0 0.0
        %866 = vmatpush1.msra.mxu0 0.0
        %867 = vmatprep.subr.mxu0 0.0
        %868 = vmatpush1.msra.mxu0 0.0
        %869 = vmatprep.subr.mxu0 0.0
        %870 = vmatpush1.msra.mxu0 0.0
        %871 = vmatprep.subr.mxu0 0.0
        %872 = vmatpush1.msra.mxu0 0.0
        %873 = vmatprep.subr.mxu0 0.0
        %874 = vmatpush1.msra.mxu0 0.0
        %875 = vmatprep.subr.mxu0 %v842
        %876 = vmatpush1.msra.mxu0 %v841
        %877 = vmatprep.subr.mxu0 0.0
        %878 = vmatpush2.msra.mxu0 0.0
        %879 = vmatprep.subr.mxu0 0.0
        %880 = vmatpush2.msra.mxu0 0.0
        %881 = vmatprep.subr.mxu0 0.0
        %882 = vmatpush2.msra.mxu0 0.0
        %883 = vmatprep.subr.mxu0 0.0
        %884 = vmatpush2.msra.mxu0 0.0
        %885 = vmatprep.subr.mxu0 0.0
        %886 = vmatpush2.msra.mxu0 0.0
        %887 = vmatprep.subr.mxu0 0.0
        %888 = vmatpush2.msra.mxu0 0.0
        %889 = vmatprep.subr.mxu0 0.0
        %890 = vmatpush2.msra.mxu0 0.0
        %891 = vmatprep.subr.mxu0 0.0
        %892 = vmatpush2.msra.mxu0 0.0
        %893 = vmatprep.subr.mxu0 0.0
        %894 = vmatpush2.msra.mxu0 0.0
        %895 = vmatprep.subr.mxu0 0.0
        %896 = vmatpush2.msra.mxu0 0.0
        %897 = vmatprep.subr.mxu0 0.0
        %898 = vmatpush2.msra.mxu0 0.0
        %899 = vmatprep.subr.mxu0 0.0
        %900 = vmatpush2.msra.mxu0 0.0
        %901 = vmatprep.subr.mxu0 0.0
        %902 = vmatpush2.msra.mxu0 0.0
        %903 = vmatprep.subr.mxu0 0.0
        %904 = vmatpush2.msra.mxu0 0.0
        %905 = vmatprep.subr.mxu0 0.0
        %906 = vmatpush2.msra.mxu0 0.0
        %907 = vmatprep.subr.mxu0 0.0
        %908 = vmatpush2.msra.mxu0 0.0
        %909 = vmatprep.mubr.f32.mxu0 0.0
        %910 = vmatmul.mubr.f32.gmra.mxu0 %v598
        %v911 = vpop.f32.mrf.mxu0
        %v912 = vadd.f32 %v594, %v911
        %v913 = vpop.f32.mrf.mxu0
        %v914 = vadd.f32 %v594, %v913
        %915 = vdwg.mxu0
        %916 = vmatprep.subr.mxu0 0.0
        %917 = vmatpush1.msra.mxu0 0.0
        %918 = vmatprep.subr.mxu0 0.0
        %919 = vmatpush1.msra.mxu0 0.0
        %920 = vmatprep.subr.mxu0 0.0
        %921 = vmatpush1.msra.mxu0 0.0
        %922 = vmatprep.subr.mxu0 0.0
        %923 = vmatpush1.msra.mxu0 0.0
        %924 = vmatprep.subr.mxu0 0.0
        %925 = vmatpush1.msra.mxu0 0.0
        %926 = vmatprep.subr.mxu0 0.0
        %927 = vmatpush1.msra.mxu0 0.0
        %928 = vmatprep.subr.mxu0 0.0
        %929 = vmatpush1.msra.mxu0 0.0
        %930 = vmatprep.subr.mxu0 0.0
        %931 = vmatpush1.msra.mxu0 0.0
        %932 = vmatprep.subr.mxu0 0.0
        %933 = vmatpush1.msra.mxu0 0.0
        %934 = vmatprep.subr.mxu0 0.0
        %935 = vmatpush1.msra.mxu0 0.0
        %936 = vmatprep.subr.mxu0 0.0
        %937 = vmatpush1.msra.mxu0 0.0
        %938 = vmatprep.subr.mxu0 0.0
        %939 = vmatpush1.msra.mxu0 0.0
        %940 = vmatprep.subr.mxu0 0.0
        %941 = vmatpush1.msra.mxu0 0.0
        %942 = vmatprep.subr.mxu0 0.0
        %943 = vmatpush1.msra.mxu0 0.0
        %944 = vmatprep.subr.mxu0 0.0
        %945 = vmatpush1.msra.mxu0 0.0
        %946 = vmatprep.subr.mxu0 %v844
        %947 = vmatpush1.msra.mxu0 %v843
        %948 = vmatprep.subr.mxu0 0.0
        %949 = vmatpush2.msra.mxu0 0.0
        %950 = vmatprep.subr.mxu0 0.0
        %951 = vmatpush2.msra.mxu0 0.0
        %952 = vmatprep.subr.mxu0 0.0
        %953 = vmatpush2.msra.mxu0 0.0
        %954 = vmatprep.subr.mxu0 0.0
        %955 = vmatpush2.msra.mxu0 0.0
        %956 = vmatprep.subr.mxu0 0.0
        %957 = vmatpush2.msra.mxu0 0.0
        %958 = vmatprep.subr.mxu0 0.0
        %959 = vmatpush2.msra.mxu0 0.0
        %960 = vmatprep.subr.mxu0 0.0
        %961 = vmatpush2.msra.mxu0 0.0
        %962 = vmatprep.subr.mxu0 0.0
        %963 = vmatpush2.msra.mxu0 0.0
        %964 = vmatprep.subr.mxu0 0.0
        %965 = vmatpush2.msra.mxu0 0.0
        %966 = vmatprep.subr.mxu0 0.0
        %967 = vmatpush2.msra.mxu0 0.0
        %968 = vmatprep.subr.mxu0 0.0
        %969 = vmatpush2.msra.mxu0 0.0
        %970 = vmatprep.subr.mxu0 0.0
        %971 = vmatpush2.msra.mxu0 0.0
        %972 = vmatprep.subr.mxu0 0.0
        %973 = vmatpush2.msra.mxu0 0.0
        %974 = vmatprep.subr.mxu0 0.0
        %975 = vmatpush2.msra.mxu0 0.0
        %976 = vmatprep.subr.mxu0 0.0
        %977 = vmatpush2.msra.mxu0 0.0
        %978 = vmatprep.subr.mxu0 0.0
        %979 = vmatpush2.msra.mxu0 0.0
        %980 = vmatprep.mubr.f32.mxu0 0.0
        %981 = vmatmul.mubr.f32.gmra.mxu0 %v598
        %v982 = vpop.f32.mrf.mxu0
        %v983 = vadd.f32 %v594, %v982
        %v984 = vpop.f32.mrf.mxu0
        %v985 = vadd.f32 %v594, %v984
        %986 = vdwg.mxu0
        %v987 = vtanh.pop %v912
        %v988 = vtanh.pop %v914
        %v989 = vtanh.pop %v983
        %v990 = vtanh.pop %v985
        %v991 = vadd.f32 %v841, %v987
        %v992 = vadd.f32 %v842, %v988
        %v993 = vadd.f32 %v843, %v989
        %v994 = vadd.f32 %v844, %v990
        %995 = vst [vmem:[%s442] sm:$0xff] %v991
        %996 = vst [vmem:[%s442 + $0x8] sm:$0xff] %v992
        %997 = vst [vmem:[%s442 + $0x10] sm:$0xff] %v993
        %998 = vst [vmem:[%s442 + $0x18] sm:$0xff] %v994
        %v999 = vadd.f32 %v991, %v987
        %v1000 = vadd.f32 %v992, %v988
        %v1001 = vadd.f32 %v993, %v989
        %v1002 = vadd.f32 %v994, %v990
        %v1003 = vmul.f32 %v999, %v470
        %v1004 = vmul.f32 %v1000, %v471
        %v1005 = vmul.f32 %v1001, %v472
        %v1006 = vmul.f32 %v1002, %v473
        %v1007 = vrot.slane %v1003, 4
        %v1008 = vadd.f32 %v1003, %v1007
        %v1009 = vrot.slane %v1008, 2
        %v1010 = vadd.f32 %v1008, %v1009
        %v1011 = vrot.slane %v1010, 1
        %v1012 = vadd.f32 %v1010, %v1011
        %v1013 = vrot.slane %v1004, 4
        %v1014 = vadd.f32 %v1004, %v1013
        %v1015 = vrot.slane %v1014, 2
        %v1016 = vadd.f32 %v1014, %v1015
        %v1017 = vrot.slane %v1016, 1
        %v1018 = vadd.f32 %v1016, %v1017
        %v1019 = vrot.slane %v1005, 4
        %v1020 = vadd.f32 %v1005, %v1019
        %v1021 = vrot.slane %v1020, 2
        %v1022 = vadd.f32 %v1020, %v1021
        %v1023 = vrot.slane %v1022, 1
        %v1024 = vadd.f32 %v1022, %v1023
        %v1025 = vrot.slane %v1006, 4
        %v1026 = vadd.f32 %v1006, %v1025
        %v1027 = vrot.slane %v1026, 2
        %v1028 = vadd.f32 %v1026, %v1027
        %v1029 = vrot.slane %v1028, 1
        %v1030 = vadd.f32 %v1028, %v1029
        %v1031 = vstv %s467
        %v1032 = vadd.f32 %v474, %v1031
        %v1037 = vcombine.low %v1012, %v1018
        %v1038 = vcombine.low %v1024, %v1030
        %v1040 = vunpack.c.l.s4 1966171168
        %v1041 = vunpack.c.0.s8 %v1040
        %v1042 = vlaneseq
        %v1043 = vshrl.u32 %v1042, 7
        %v1044 = vsub.s32 %v1041, %v1043
        %v1045 = vrot.slane %v1037, %v1044
        %v1047 = vunpack.c.l.s4 1966171168
        %v1048 = vunpack.c.0.s8 %v1047
        %v1049 = vlaneseq
        %v1050 = vshrl.u32 %v1049, 7
        %v1051 = vsub.s32 %v1048, %v1050
        %v1052 = vrot.slane %v1038, %v1051
        %v1053 = vcombine.low %v1045, %v1052
        %v1055 = vunpack.c.l.s4 1966171168
        %v1056 = vunpack.c.0.s8 %v1055
        %v1057 = vlaneseq
        %v1058 = vshrl.u32 %v1057, 7
        %v1059 = vsub.s32 %v1056, %v1058
        %v1060 = vrot.slane %v1053, %v1059
        %v1062 = vsub.f32 %v469, %v1060
        %v1063 = vrcp.pop %v1032
        %v1064 = vmul.f32 %v1062, %v1063
        %v1066 = vlaneseq
        %v1067 = vshrl.u32 %v1066, 7
        %v1068 = vsub.s32 0, %v1067
        %v1069 = vrot.slane %v1064, %v1068
        %v1070 = vlaneseq
        %v1071 = vshrl.u32 %v1070, 7
        %v1072 = vsub.s32 1, %v1071
        %v1073 = vrot.slane %v1064, %v1072
        %v1074 = vlaneseq
        %v1075 = vshrl.u32 %v1074, 7
        %v1076 = vsub.s32 2, %v1075
        %v1077 = vrot.slane %v1064, %v1076
        %v1078 = vlaneseq
        %v1079 = vshrl.u32 %v1078, 7
        %v1080 = vsub.s32 3, %v1079
        %v1081 = vrot.slane %v1064, %v1080
        %v1086 = vmul.f32 %v1069, %v470
        %v1087 = vmul.f32 %v1073, %v471
        %v1088 = vmul.f32 %v1077, %v472
        %v1089 = vmul.f32 %v1081, %v473
        %v1090 = vadd.f32 %v991, %v1086
        %v1091 = vadd.f32 %v992, %v1087
        %v1092 = vadd.f32 %v993, %v1088
        %v1093 = vadd.f32 %v994, %v1089
        %1094 = vmatprep.subr.mxu0 0.0
        %1095 = vmatpush1.msra.mxu0 0.0
        %1096 = vmatprep.subr.mxu0 0.0
        %1097 = vmatpush1.msra.mxu0 0.0
        %1098 = vmatprep.subr.mxu0 0.0
        %1099 = vmatpush1.msra.mxu0 0.0
        %1100 = vmatprep.subr.mxu0 0.0
        %1101 = vmatpush1.msra.mxu0 0.0
        %1102 = vmatprep.subr.mxu0 0.0
        %1103 = vmatpush1.msra.mxu0 0.0
        %1104 = vmatprep.subr.mxu0 0.0
        %1105 = vmatpush1.msra.mxu0 0.0
        %1106 = vmatprep.subr.mxu0 0.0
        %1107 = vmatpush1.msra.mxu0 0.0
        %1108 = vmatprep.subr.mxu0 0.0
        %1109 = vmatpush1.msra.mxu0 0.0
        %1110 = vmatprep.subr.mxu0 0.0
        %1111 = vmatpush1.msra.mxu0 0.0
        %1112 = vmatprep.subr.mxu0 0.0
        %1113 = vmatpush1.msra.mxu0 0.0
        %1114 = vmatprep.subr.mxu0 0.0
        %1115 = vmatpush1.msra.mxu0 0.0
        %1116 = vmatprep.subr.mxu0 0.0
        %1117 = vmatpush1.msra.mxu0 0.0
        %1118 = vmatprep.subr.mxu0 0.0
        %1119 = vmatpush1.msra.mxu0 0.0
        %1120 = vmatprep.subr.mxu0 0.0
        %1121 = vmatpush1.msra.mxu0 0.0
        %1122 = vmatprep.subr.mxu0 0.0
        %1123 = vmatpush1.msra.mxu0 0.0
        %1124 = vmatprep.subr.mxu0 %v1091
        %1125 = vmatpush1.msra.mxu0 %v1090
        %1126 = vmatprep.subr.mxu0 0.0
        %1127 = vmatpush2.msra.mxu0 0.0
        %1128 = vmatprep.subr.mxu0 0.0
        %1129 = vmatpush2.msra.mxu0 0.0
        %1130 = vmatprep.subr.mxu0 0.0
        %1131 = vmatpush2.msra.mxu0 0.0
        %1132 = vmatprep.subr.mxu0 0.0
        %1133 = vmatpush2.msra.mxu0 0.0
        %1134 = vmatprep.subr.mxu0 0.0
        %1135 = vmatpush2.msra.mxu0 0.0
        %1136 = vmatprep.subr.mxu0 0.0
        %1137 = vmatpush2.msra.mxu0 0.0
        %1138 = vmatprep.subr.mxu0 0.0
        %1139 = vmatpush2.msra.mxu0 0.0
        %1140 = vmatprep.subr.mxu0 0.0
        %1141 = vmatpush2.msra.mxu0 0.0
        %1142 = vmatprep.subr.mxu0 0.0
        %1143 = vmatpush2.msra.mxu0 0.0
        %1144 = vmatprep.subr.mxu0 0.0
        %1145 = vmatpush2.msra.mxu0 0.0
        %1146 = vmatprep.subr.mxu0 0.0
        %1147 = vmatpush2.msra.mxu0 0.0
        %1148 = vmatprep.subr.mxu0 0.0
        %1149 = vmatpush2.msra.mxu0 0.0
        %1150 = vmatprep.subr.mxu0 0.0
        %1151 = vmatpush2.msra.mxu0 0.0
        %1152 = vmatprep.subr.mxu0 0.0
        %1153 = vmatpush2.msra.mxu0 0.0
        %1154 = vmatprep.subr.mxu0 0.0
        %1155 = vmatpush2.msra.mxu0 0.0
        %1156 = vmatprep.subr.mxu0 0.0
        %1157 = vmatpush2.msra.mxu0 0.0
        %1158 = vmatprep.mubr.f32.mxu0 0.0
        %1159 = vmatmul.mubr.f32.gmra.mxu0 %v598
        %v1160 = vpop.f32.mrf.mxu0
        %v1161 = vadd.f32 %v594, %v1160
        %v1162 = vpop.f32.mrf.mxu0
        %v1163 = vadd.f32 %v594, %v1162
        %1164 = vdwg.mxu0
        %1165 = vmatprep.subr.mxu0 0.0
        %1166 = vmatpush1.msra.mxu0 0.0
        %1167 = vmatprep.subr.mxu0 0.0
        %1168 = vmatpush1.msra.mxu0 0.0
        %1169 = vmatprep.subr.mxu0 0.0
        %1170 = vmatpush1.msra.mxu0 0.0
        %1171 = vmatprep.subr.mxu0 0.0
        %1172 = vmatpush1.msra.mxu0 0.0
        %1173 = vmatprep.subr.mxu0 0.0
        %1174 = vmatpush1.msra.mxu0 0.0
        %1175 = vmatprep.subr.mxu0 0.0
        %1176 = vmatpush1.msra.mxu0 0.0
        %1177 = vmatprep.subr.mxu0 0.0
        %1178 = vmatpush1.msra.mxu0 0.0
        %1179 = vmatprep.subr.mxu0 0.0
        %1180 = vmatpush1.msra.mxu0 0.0
        %1181 = vmatprep.subr.mxu0 0.0
        %1182 = vmatpush1.msra.mxu0 0.0
        %1183 = vmatprep.subr.mxu0 0.0
        %1184 = vmatpush1.msra.mxu0 0.0
        %1185 = vmatprep.subr.mxu0 0.0
        %1186 = vmatpush1.msra.mxu0 0.0
        %1187 = vmatprep.subr.mxu0 0.0
        %1188 = vmatpush1.msra.mxu0 0.0
        %1189 = vmatprep.subr.mxu0 0.0
        %1190 = vmatpush1.msra.mxu0 0.0
        %1191 = vmatprep.subr.mxu0 0.0
        %1192 = vmatpush1.msra.mxu0 0.0
        %1193 = vmatprep.subr.mxu0 0.0
        %1194 = vmatpush1.msra.mxu0 0.0
        %1195 = vmatprep.subr.mxu0 %v1093
        %1196 = vmatpush1.msra.mxu0 %v1092
        %1197 = vmatprep.subr.mxu0 0.0
        %1198 = vmatpush2.msra.mxu0 0.0
        %1199 = vmatprep.subr.mxu0 0.0
        %1200 = vmatpush2.msra.mxu0 0.0
        %1201 = vmatprep.subr.mxu0 0.0
        %1202 = vmatpush2.msra.mxu0 0.0
        %1203 = vmatprep.subr.mxu0 0.0
        %1204 = vmatpush2.msra.mxu0 0.0
        %1205 = vmatprep.subr.mxu0 0.0
        %1206 = vmatpush2.msra.mxu0 0.0
        %1207 = vmatprep.subr.mxu0 0.0
        %1208 = vmatpush2.msra.mxu0 0.0
        %1209 = vmatprep.subr.mxu0 0.0
        %1210 = vmatpush2.msra.mxu0 0.0
        %1211 = vmatprep.subr.mxu0 0.0
        %1212 = vmatpush2.msra.mxu0 0.0
        %1213 = vmatprep.subr.mxu0 0.0
        %1214 = vmatpush2.msra.mxu0 0.0
        %1215 = vmatprep.subr.mxu0 0.0
        %1216 = vmatpush2.msra.mxu0 0.0
        %1217 = vmatprep.subr.mxu0 0.0
        %1218 = vmatpush2.msra.mxu0 0.0
        %1219 = vmatprep.subr.mxu0 0.0
        %1220 = vmatpush2.msra.mxu0 0.0
        %1221 = vmatprep.subr.mxu0 0.0
        %1222 = vmatpush2.msra.mxu0 0.0
        %1223 = vmatprep.subr.mxu0 0.0
        %1224 = vmatpush2.msra.mxu0 0.0
        %1225 = vmatprep.subr.mxu0 0.0
        %1226 = vmatpush2.msra.mxu0 0.0
        %1227 = vmatprep.subr.mxu0 0.0
        %1228 = vmatpush2.msra.mxu0 0.0
        %1229 = vmatprep.mubr.f32.mxu0 0.0
        %1230 = vmatmul.mubr.f32.gmra.mxu0 %v598
        %v1231 = vpop.f32.mrf.mxu0
        %v1232 = vadd.f32 %v594, %v1231
        %v1233 = vpop.f32.mrf.mxu0
        %v1234 = vadd.f32 %v594, %v1233
        %1235 = vdwg.mxu0
        %v1236 = vtanh.pop %v1161
        %v1237 = vtanh.pop %v1163
        %v1238 = vtanh.pop %v1232
        %v1239 = vtanh.pop %v1234
        %v1240 = vadd.f32 %v1090, %v1236
        %v1241 = vadd.f32 %v1091, %v1237
        %v1242 = vadd.f32 %v1092, %v1238
        %v1243 = vadd.f32 %v1093, %v1239
        %1244 = vst [vmem:[%s449] sm:$0xff] %v1240
        %1245 = vst [vmem:[%s449 + $0x8] sm:$0xff] %v1241
        %1246 = vst [vmem:[%s449 + $0x10] sm:$0xff] %v1242
        %1247 = vst [vmem:[%s449 + $0x18] sm:$0xff] %v1243
        %v1248 = vadd.f32 %v1240, %v1236
        %v1249 = vadd.f32 %v1241, %v1237
        %v1250 = vadd.f32 %v1242, %v1238
        %v1251 = vadd.f32 %v1243, %v1239
        %v1252 = vmul.f32 %v1248, %v470
        %v1253 = vmul.f32 %v1249, %v471
        %v1254 = vmul.f32 %v1250, %v472
        %v1255 = vmul.f32 %v1251, %v473
        %v1256 = vrot.slane %v1252, 4
        %v1257 = vadd.f32 %v1252, %v1256
        %v1258 = vrot.slane %v1257, 2
        %v1259 = vadd.f32 %v1257, %v1258
        %v1260 = vrot.slane %v1259, 1
        %v1261 = vadd.f32 %v1259, %v1260
        %v1262 = vrot.slane %v1253, 4
        %v1263 = vadd.f32 %v1253, %v1262
        %v1264 = vrot.slane %v1263, 2
        %v1265 = vadd.f32 %v1263, %v1264
        %v1266 = vrot.slane %v1265, 1
        %v1267 = vadd.f32 %v1265, %v1266
        %v1268 = vrot.slane %v1254, 4
        %v1269 = vadd.f32 %v1254, %v1268
        %v1270 = vrot.slane %v1269, 2
        %v1271 = vadd.f32 %v1269, %v1270
        %v1272 = vrot.slane %v1271, 1
        %v1273 = vadd.f32 %v1271, %v1272
        %v1274 = vrot.slane %v1255, 4
        %v1275 = vadd.f32 %v1255, %v1274
        %v1276 = vrot.slane %v1275, 2
        %v1277 = vadd.f32 %v1275, %v1276
        %v1278 = vrot.slane %v1277, 1
        %v1279 = vadd.f32 %v1277, %v1278
        %v1280 = vstv %s468
        %v1281 = vadd.f32 %v474, %v1280
        %v1286 = vcombine.low %v1261, %v1267
        %v1287 = vcombine.low %v1273, %v1279
        %v1289 = vunpack.c.l.s4 1966171168
        %v1290 = vunpack.c.0.s8 %v1289
        %v1291 = vlaneseq
        %v1292 = vshrl.u32 %v1291, 7
        %v1293 = vsub.s32 %v1290, %v1292
        %v1294 = vrot.slane %v1286, %v1293
        %v1296 = vunpack.c.l.s4 1966171168
        %v1297 = vunpack.c.0.s8 %v1296
        %v1298 = vlaneseq
        %v1299 = vshrl.u32 %v1298, 7
        %v1300 = vsub.s32 %v1297, %v1299
        %v1301 = vrot.slane %v1287, %v1300
        %v1302 = vcombine.low %v1294, %v1301
        %v1304 = vunpack.c.l.s4 1966171168
        %v1305 = vunpack.c.0.s8 %v1304
        %v1306 = vlaneseq
        %v1307 = vshrl.u32 %v1306, 7
        %v1308 = vsub.s32 %v1305, %v1307
        %v1309 = vrot.slane %v1302, %v1308
        %v1311 = vsub.f32 %v469, %v1309
        %v1312 = vrcp.pop %v1281
        %v1313 = vmul.f32 %v1311, %v1312
        %v1315 = vlaneseq
        %v1316 = vshrl.u32 %v1315, 7
        %v1317 = vsub.s32 0, %v1316
        %v1318 = vrot.slane %v1313, %v1317
        %v1319 = vlaneseq
        %v1320 = vshrl.u32 %v1319, 7
        %v1321 = vsub.s32 1, %v1320
        %v1322 = vrot.slane %v1313, %v1321
        %v1323 = vlaneseq
        %v1324 = vshrl.u32 %v1323, 7
        %v1325 = vsub.s32 2, %v1324
        %v1326 = vrot.slane %v1313, %v1325
        %v1327 = vlaneseq
        %v1328 = vshrl.u32 %v1327, 7
        %v1329 = vsub.s32 3, %v1328
        %v1330 = vrot.slane %v1313, %v1329
        %v1335 = vmul.f32 %v1318, %v470
        %v1336 = vmul.f32 %v1322, %v471
        %v1337 = vmul.f32 %v1326, %v472
        %v1338 = vmul.f32 %v1330, %v473
        %v1339 = vadd.f32 %v1240, %v1335
        %v1340 = vadd.f32 %v1241, %v1336
        %v1341 = vadd.f32 %v1242, %v1337
        %v1342 = vadd.f32 %v1243, %v1338
        %1343 = vmatprep.subr.mxu0 0.0
        %1344 = vmatpush1.msra.mxu0 0.0
        %1345 = vmatprep.subr.mxu0 0.0
        %1346 = vmatpush1.msra.mxu0 0.0
        %1347 = vmatprep.subr.mxu0 0.0
        %1348 = vmatpush1.msra.mxu0 0.0
        %1349 = vmatprep.subr.mxu0 0.0
        %1350 = vmatpush1.msra.mxu0 0.0
        %1351 = vmatprep.subr.mxu0 0.0
        %1352 = vmatpush1.msra.mxu0 0.0
        %1353 = vmatprep.subr.mxu0 0.0
        %1354 = vmatpush1.msra.mxu0 0.0
        %1355 = vmatprep.subr.mxu0 0.0
        %1356 = vmatpush1.msra.mxu0 0.0
        %1357 = vmatprep.subr.mxu0 0.0
        %1358 = vmatpush1.msra.mxu0 0.0
        %1359 = vmatprep.subr.mxu0 0.0
        %1360 = vmatpush1.msra.mxu0 0.0
        %1361 = vmatprep.subr.mxu0 0.0
        %1362 = vmatpush1.msra.mxu0 0.0
        %1363 = vmatprep.subr.mxu0 0.0
        %1364 = vmatpush1.msra.mxu0 0.0
        %1365 = vmatprep.subr.mxu0 0.0
        %1366 = vmatpush1.msra.mxu0 0.0
        %1367 = vmatprep.subr.mxu0 0.0
        %1368 = vmatpush1.msra.mxu0 0.0
        %1369 = vmatprep.subr.mxu0 0.0
        %1370 = vmatpush1.msra.mxu0 0.0
        %1371 = vmatprep.subr.mxu0 0.0
        %1372 = vmatpush1.msra.mxu0 0.0
        %1373 = vmatprep.subr.mxu0 %v1340
        %1374 = vmatpush1.msra.mxu0 %v1339
        %1375 = vmatprep.subr.mxu0 0.0
        %1376 = vmatpush2.msra.mxu0 0.0
        %1377 = vmatprep.subr.mxu0 0.0
        %1378 = vmatpush2.msra.mxu0 0.0
        %1379 = vmatprep.subr.mxu0 0.0
        %1380 = vmatpush2.msra.mxu0 0.0
        %1381 = vmatprep.subr.mxu0 0.0
        %1382 = vmatpush2.msra.mxu0 0.0
        %1383 = vmatprep.subr.mxu0 0.0
        %1384 = vmatpush2.msra.mxu0 0.0
        %1385 = vmatprep.subr.mxu0 0.0
        %1386 = vmatpush2.msra.mxu0 0.0
        %1387 = vmatprep.subr.mxu0 0.0
        %1388 = vmatpush2.msra.mxu0 0.0
        %1389 = vmatprep.subr.mxu0 0.0
        %1390 = vmatpush2.msra.mxu0 0.0
        %1391 = vmatprep.subr.mxu0 0.0
        %1392 = vmatpush2.msra.mxu0 0.0
        %1393 = vmatprep.subr.mxu0 0.0
        %1394 = vmatpush2.msra.mxu0 0.0
        %1395 = vmatprep.subr.mxu0 0.0
        %1396 = vmatpush2.msra.mxu0 0.0
        %1397 = vmatprep.subr.mxu0 0.0
        %1398 = vmatpush2.msra.mxu0 0.0
        %1399 = vmatprep.subr.mxu0 0.0
        %1400 = vmatpush2.msra.mxu0 0.0
        %1401 = vmatprep.subr.mxu0 0.0
        %1402 = vmatpush2.msra.mxu0 0.0
        %1403 = vmatprep.subr.mxu0 0.0
        %1404 = vmatpush2.msra.mxu0 0.0
        %1405 = vmatprep.subr.mxu0 0.0
        %1406 = vmatpush2.msra.mxu0 0.0
        %1407 = vmatprep.mubr.f32.mxu0 0.0
        %1408 = vmatmul.mubr.f32.gmra.mxu0 %v598
        %v1409 = vpop.f32.mrf.mxu0
        %v1410 = vadd.f32 %v594, %v1409
        %v1411 = vpop.f32.mrf.mxu0
        %v1412 = vadd.f32 %v594, %v1411
        %1413 = vdwg.mxu0
        %1414 = vmatprep.subr.mxu0 0.0
        %1415 = vmatpush1.msra.mxu0 0.0
        %1416 = vmatprep.subr.mxu0 0.0
        %1417 = vmatpush1.msra.mxu0 0.0
        %1418 = vmatprep.subr.mxu0 0.0
        %1419 = vmatpush1.msra.mxu0 0.0
        %1420 = vmatprep.subr.mxu0 0.0
        %1421 = vmatpush1.msra.mxu0 0.0
        %1422 = vmatprep.subr.mxu0 0.0
        %1423 = vmatpush1.msra.mxu0 0.0
        %1424 = vmatprep.subr.mxu0 0.0
        %1425 = vmatpush1.msra.mxu0 0.0
        %1426 = vmatprep.subr.mxu0 0.0
        %1427 = vmatpush1.msra.mxu0 0.0
        %1428 = vmatprep.subr.mxu0 0.0
        %1429 = vmatpush1.msra.mxu0 0.0
        %1430 = vmatprep.subr.mxu0 0.0
        %1431 = vmatpush1.msra.mxu0 0.0
        %1432 = vmatprep.subr.mxu0 0.0
        %1433 = vmatpush1.msra.mxu0 0.0
        %1434 = vmatprep.subr.mxu0 0.0
        %1435 = vmatpush1.msra.mxu0 0.0
        %1436 = vmatprep.subr.mxu0 0.0
        %1437 = vmatpush1.msra.mxu0 0.0
        %1438 = vmatprep.subr.mxu0 0.0
        %1439 = vmatpush1.msra.mxu0 0.0
        %1440 = vmatprep.subr.mxu0 0.0
        %1441 = vmatpush1.msra.mxu0 0.0
        %1442 = vmatprep.subr.mxu0 0.0
        %1443 = vmatpush1.msra.mxu0 0.0
        %1444 = vmatprep.subr.mxu0 %v1342
        %1445 = vmatpush1.msra.mxu0 %v1341
        %1446 = vmatprep.subr.mxu0 0.0
        %1447 = vmatpush2.msra.mxu0 0.0
        %1448 = vmatprep.subr.mxu0 0.0
        %1449 = vmatpush2.msra.mxu0 0.0
        %1450 = vmatprep.subr.mxu0 0.0
        %1451 = vmatpush2.msra.mxu0 0.0
        %1452 = vmatprep.subr.mxu0 0.0
        %1453 = vmatpush2.msra.mxu0 0.0
        %1454 = vmatprep.subr.mxu0 0.0
        %1455 = vmatpush2.msra.mxu0 0.0
        %1456 = vmatprep.subr.mxu0 0.0
        %1457 = vmatpush2.msra.mxu0 0.0
        %1458 = vmatprep.subr.mxu0 0.0
        %1459 = vmatpush2.msra.mxu0 0.0
        %1460 = vmatprep.subr.mxu0 0.0
        %1461 = vmatpush2.msra.mxu0 0.0
        %1462 = vmatprep.subr.mxu0 0.0
        %1463 = vmatpush2.msra.mxu0 0.0
        %1464 = vmatprep.subr.mxu0 0.0
        %1465 = vmatpush2.msra.mxu0 0.0
        %1466 = vmatprep.subr.mxu0 0.0
        %1467 = vmatpush2.msra.mxu0 0.0
        %1468 = vmatprep.subr.mxu0 0.0
        %1469 = vmatpush2.msra.mxu0 0.0
        %1470 = vmatprep.subr.mxu0 0.0
        %1471 = vmatpush2.msra.mxu0 0.0
        %1472 = vmatprep.subr.mxu0 0.0
        %1473 = vmatpush2.msra.mxu0 0.0
        %1474 = vmatprep.subr.mxu0 0.0
        %1475 = vmatpush2.msra.mxu0 0.0
        %1476 = vmatprep.subr.mxu0 0.0
        %1477 = vmatpush2.msra.mxu0 0.0
        %1478 = vmatprep.mubr.f32.mxu0 0.0
        %1479 = vmatmul.mubr.f32.gmra.mxu0 %v598
        %v1480 = vpop.f32.mrf.mxu0
        %v1481 = vadd.f32 %v594, %v1480
        %v1482 = vpop.f32.mrf.mxu0
        %v1483 = vadd.f32 %v594, %v1482
        %1484 = vdwg.mxu0
        %v1485 = vtanh.pop %v1410
        %v1486 = vtanh.pop %v1412
        %v1487 = vtanh.pop %v1481
        %v1488 = vtanh.pop %v1483
        %v1489 = vadd.f32 %v1339, %v1485
        %v1490 = vadd.f32 %v1340, %v1486
        %v1491 = vadd.f32 %v1341, %v1487
        %v1492 = vadd.f32 %v1342, %v1488
        %1493 = vst [vmem:[%s456] sm:$0xff] %v1489
        %1494 = vst [vmem:[%s456 + $0x8] sm:$0xff] %v1490
        %1495 = vst [vmem:[%s456 + $0x10] sm:$0xff] %v1491
        %1496 = vst [vmem:[%s456 + $0x18] sm:$0xff] %v1492
        %v1497 = vld [vmem:[%s385 + $0x4] sm:$0xf]
        %v1498 = vld [vmem:[%s394 + $0x20] sm:$0xff]
        %v1499 = vld [vmem:[%s394 + $0x28] sm:$0xff]
        %v1500 = vld [vmem:[%s394 + $0x30] sm:$0xff]
        %v1501 = vld [vmem:[%s394 + $0x38] sm:$0xff]
        %v1502 = vld [vmem:[%s403 + $0x4] sm:$0xf]
        %v1504 = vlaneseq
        %v1505 = vshrl.u32 %v1504, 7
        %v1506 = vsub.s32 0, %v1505
        %v1507 = vrot.slane %v1497, %v1506
        %v1508 = vlaneseq
        %v1509 = vshrl.u32 %v1508, 7
        %v1510 = vsub.s32 1, %v1509
        %v1511 = vrot.slane %v1497, %v1510
        %v1512 = vlaneseq
        %v1513 = vshrl.u32 %v1512, 7
        %v1514 = vsub.s32 2, %v1513
        %v1515 = vrot.slane %v1497, %v1514
        %v1516 = vlaneseq
        %v1517 = vshrl.u32 %v1516, 7
        %v1518 = vsub.s32 3, %v1517
        %v1519 = vrot.slane %v1497, %v1518
        %v1524 = vmul.f32 %v1507, %v1498
        %v1525 = vmul.f32 %v1511, %v1499
        %v1526 = vmul.f32 %v1515, %v1500
        %v1527 = vmul.f32 %v1519, %v1501
        %v1528 = vmul.f32 %v1524, %v1498
        %v1529 = vmul.f32 %v1525, %v1499
        %v1530 = vmul.f32 %v1526, %v1500
        %v1531 = vmul.f32 %v1527, %v1501
        %v1532 = vrot.slane %v1528, 4
        %v1533 = vadd.f32 %v1528, %v1532
        %v1534 = vrot.slane %v1533, 2
        %v1535 = vadd.f32 %v1533, %v1534
        %v1536 = vrot.slane %v1535, 1
        %v1537 = vadd.f32 %v1535, %v1536
        %v1538 = vrot.slane %v1529, 4
        %v1539 = vadd.f32 %v1529, %v1538
        %v1540 = vrot.slane %v1539, 2
        %v1541 = vadd.f32 %v1539, %v1540
        %v1542 = vrot.slane %v1541, 1
        %v1543 = vadd.f32 %v1541, %v1542
        %v1544 = vrot.slane %v1530, 4
        %v1545 = vadd.f32 %v1530, %v1544
        %v1546 = vrot.slane %v1545, 2
        %v1547 = vadd.f32 %v1545, %v1546
        %v1548 = vrot.slane %v1547, 1
        %v1549 = vadd.f32 %v1547, %v1548
        %v1550 = vrot.slane %v1531, 4
        %v1551 = vadd.f32 %v1531, %v1550
        %v1552 = vrot.slane %v1551, 2
        %v1553 = vadd.f32 %v1551, %v1552
        %v1554 = vrot.slane %v1553, 1
        %v1555 = vadd.f32 %v1553, %v1554
        %v1556 = vadd.f32 %v1502, %v528
        %v1561 = vcombine.low %v1537, %v1543
        %v1562 = vcombine.low %v1549, %v1555
        %v1564 = vunpack.c.l.s4 1966171168
        %v1565 = vunpack.c.0.s8 %v1564
        %v1566 = vlaneseq
        %v1567 = vshrl.u32 %v1566, 7
        %v1568 = vsub.s32 %v1565, %v1567
        %v1569 = vrot.slane %v1561, %v1568
        %v1571 = vunpack.c.l.s4 1966171168
        %v1572 = vunpack.c.0.s8 %v1571
        %v1573 = vlaneseq
        %v1574 = vshrl.u32 %v1573, 7
        %v1575 = vsub.s32 %v1572, %v1574
        %v1576 = vrot.slane %v1562, %v1575
        %v1577 = vcombine.low %v1569, %v1576
        %v1579 = vunpack.c.l.s4 1966171168
        %v1580 = vunpack.c.0.s8 %v1579
        %v1581 = vlaneseq
        %v1582 = vshrl.u32 %v1581, 7
        %v1583 = vsub.s32 %v1580, %v1582
        %v1584 = vrot.slane %v1577, %v1583
        %v1586 = vsub.f32 %v1497, %v1584
        %v1587 = vrcp.pop %v1556
        %v1588 = vmul.f32 %v1586, %v1587
        %v1590 = vlaneseq
        %v1591 = vshrl.u32 %v1590, 7
        %v1592 = vsub.s32 0, %v1591
        %v1593 = vrot.slane %v1588, %v1592
        %v1594 = vlaneseq
        %v1595 = vshrl.u32 %v1594, 7
        %v1596 = vsub.s32 1, %v1595
        %v1597 = vrot.slane %v1588, %v1596
        %v1598 = vlaneseq
        %v1599 = vshrl.u32 %v1598, 7
        %v1600 = vsub.s32 2, %v1599
        %v1601 = vrot.slane %v1588, %v1600
        %v1602 = vlaneseq
        %v1603 = vshrl.u32 %v1602, 7
        %v1604 = vsub.s32 3, %v1603
        %v1605 = vrot.slane %v1588, %v1604
        %v1610 = vmul.f32 %v1593, %v1498
        %v1611 = vmul.f32 %v1597, %v1499
        %v1612 = vmul.f32 %v1601, %v1500
        %v1613 = vmul.f32 %v1605, %v1501
        %v1614 = vadd.f32 %v1524, %v1610
        %v1615 = vadd.f32 %v1525, %v1611
        %v1616 = vadd.f32 %v1526, %v1612
        %v1617 = vadd.f32 %v1527, %v1613
        %1618 = vmatprep.subr.mxu0 0.0
        %1619 = vmatpush1.msra.mxu0 0.0
        %1620 = vmatprep.subr.mxu0 0.0
        %1621 = vmatpush1.msra.mxu0 0.0
        %1622 = vmatprep.subr.mxu0 0.0
        %1623 = vmatpush1.msra.mxu0 0.0
        %1624 = vmatprep.subr.mxu0 0.0
        %1625 = vmatpush1.msra.mxu0 0.0
        %1626 = vmatprep.subr.mxu0 0.0
        %1627 = vmatpush1.msra.mxu0 0.0
        %1628 = vmatprep.subr.mxu0 0.0
        %1629 = vmatpush1.msra.mxu0 0.0
        %1630 = vmatprep.subr.mxu0 0.0
        %1631 = vmatpush1.msra.mxu0 0.0
        %1632 = vmatprep.subr.mxu0 0.0
        %1633 = vmatpush1.msra.mxu0 0.0
        %1634 = vmatprep.subr.mxu0 0.0
        %1635 = vmatpush1.msra.mxu0 0.0
        %1636 = vmatprep.subr.mxu0 0.0
        %1637 = vmatpush1.msra.mxu0 0.0
        %1638 = vmatprep.subr.mxu0 0.0
        %1639 = vmatpush1.msra.mxu0 0.0
        %1640 = vmatprep.subr.mxu0 0.0
        %1641 = vmatpush1.msra.mxu0 0.0
        %1642 = vmatprep.subr.mxu0 0.0
        %1643 = vmatpush1.msra.mxu0 0.0
        %1644 = vmatprep.subr.mxu0 0.0
        %1645 = vmatpush1.msra.mxu0 0.0
        %1646 = vmatprep.subr.mxu0 0.0
        %1647 = vmatpush1.msra.mxu0 0.0
        %1648 = vmatprep.subr.mxu0 %v1615
        %1649 = vmatpush1.msra.mxu0 %v1614
        %1650 = vmatprep.subr.mxu0 0.0
        %1651 = vmatpush2.msra.mxu0 0.0
        %1652 = vmatprep.subr.mxu0 0.0
        %1653 = vmatpush2.msra.mxu0 0.0
        %1654 = vmatprep.subr.mxu0 0.0
        %1655 = vmatpush2.msra.mxu0 0.0
        %1656 = vmatprep.subr.mxu0 0.0
        %1657 = vmatpush2.msra.mxu0 0.0
        %1658 = vmatprep.subr.mxu0 0.0
        %1659 = vmatpush2.msra.mxu0 0.0
        %1660 = vmatprep.subr.mxu0 0.0
        %1661 = vmatpush2.msra.mxu0 0.0
        %1662 = vmatprep.subr.mxu0 0.0
        %1663 = vmatpush2.msra.mxu0 0.0
        %1664 = vmatprep.subr.mxu0 0.0
        %1665 = vmatpush2.msra.mxu0 0.0
        %1666 = vmatprep.subr.mxu0 0.0
        %1667 = vmatpush2.msra.mxu0 0.0
        %1668 = vmatprep.subr.mxu0 0.0
        %1669 = vmatpush2.msra.mxu0 0.0
        %1670 = vmatprep.subr.mxu0 0.0
        %1671 = vmatpush2.msra.mxu0 0.0
        %1672 = vmatprep.subr.mxu0 0.0
        %1673 = vmatpush2.msra.mxu0 0.0
        %1674 = vmatprep.subr.mxu0 0.0
        %1675 = vmatpush2.msra.mxu0 0.0
        %1676 = vmatprep.subr.mxu0 0.0
        %1677 = vmatpush2.msra.mxu0 0.0
        %1678 = vmatprep.subr.mxu0 0.0
        %1679 = vmatpush2.msra.mxu0 0.0
        %1680 = vmatprep.subr.mxu0 0.0
        %1681 = vmatpush2.msra.mxu0 0.0
        %1682 = vmatprep.mubr.f32.mxu0 0.0
        %1683 = vmatmul.mubr.f32.gmra.mxu0 %v598
        %v1684 = vpop.f32.mrf.mxu0
        %v1685 = vadd.f32 %v594, %v1684
        %v1686 = vpop.f32.mrf.mxu0
        %v1687 = vadd.f32 %v594, %v1686
        %1688 = vdwg.mxu0
        %1689 = vmatprep.subr.mxu0 0.0
        %1690 = vmatpush1.msra.mxu0 0.0
        %1691 = vmatprep.subr.mxu0 0.0
        %1692 = vmatpush1.msra.mxu0 0.0
        %1693 = vmatprep.subr.mxu0 0.0
        %1694 = vmatpush1.msra.mxu0 0.0
        %1695 = vmatprep.subr.mxu0 0.0
        %1696 = vmatpush1.msra.mxu0 0.0
        %1697 = vmatprep.subr.mxu0 0.0
        %1698 = vmatpush1.msra.mxu0 0.0
        %1699 = vmatprep.subr.mxu0 0.0
        %1700 = vmatpush1.msra.mxu0 0.0
        %1701 = vmatprep.subr.mxu0 0.0
        %1702 = vmatpush1.msra.mxu0 0.0
        %1703 = vmatprep.subr.mxu0 0.0
        %1704 = vmatpush1.msra.mxu0 0.0
        %1705 = vmatprep.subr.mxu0 0.0
        %1706 = vmatpush1.msra.mxu0 0.0
        %1707 = vmatprep.subr.mxu0 0.0
        %1708 = vmatpush1.msra.mxu0 0.0
        %1709 = vmatprep.subr.mxu0 0.0
        %1710 = vmatpush1.msra.mxu0 0.0
        %1711 = vmatprep.subr.mxu0 0.0
        %1712 = vmatpush1.msra.mxu0 0.0
        %1713 = vmatprep.subr.mxu0 0.0
        %1714 = vmatpush1.msra.mxu0 0.0
        %1715 = vmatprep.subr.mxu0 0.0
        %1716 = vmatpush1.msra.mxu0 0.0
        %1717 = vmatprep.subr.mxu0 0.0
        %1718 = vmatpush1.msra.mxu0 0.0
        %1719 = vmatprep.subr.mxu0 %v1617
        %1720 = vmatpush1.msra.mxu0 %v1616
        %1721 = vmatprep.subr.mxu0 0.0
        %1722 = vmatpush2.msra.mxu0 0.0
        %1723 = vmatprep.subr.mxu0 0.0
        %1724 = vmatpush2.msra.mxu0 0.0
        %1725 = vmatprep.subr.mxu0 0.0
        %1726 = vmatpush2.msra.mxu0 0.0
        %1727 = vmatprep.subr.mxu0 0.0
        %1728 = vmatpush2.msra.mxu0 0.0
        %1729 = vmatprep.subr.mxu0 0.0
        %1730 = vmatpush2.msra.mxu0 0.0
        %1731 = vmatprep.subr.mxu0 0.0
        %1732 = vmatpush2.msra.mxu0 0.0
        %1733 = vmatprep.subr.mxu0 0.0
        %1734 = vmatpush2.msra.mxu0 0.0
        %1735 = vmatprep.subr.mxu0 0.0
        %1736 = vmatpush2.msra.mxu0 0.0
        %1737 = vmatprep.subr.mxu0 0.0
        %1738 = vmatpush2.msra.mxu0 0.0
        %1739 = vmatprep.subr.mxu0 0.0
        %1740 = vmatpush2.msra.mxu0 0.0
        %1741 = vmatprep.subr.mxu0 0.0
        %1742 = vmatpush2.msra.mxu0 0.0
        %1743 = vmatprep.subr.mxu0 0.0
        %1744 = vmatpush2.msra.mxu0 0.0
        %1745 = vmatprep.subr.mxu0 0.0
        %1746 = vmatpush2.msra.mxu0 0.0
        %1747 = vmatprep.subr.mxu0 0.0
        %1748 = vmatpush2.msra.mxu0 0.0
        %1749 = vmatprep.subr.mxu0 0.0
        %1750 = vmatpush2.msra.mxu0 0.0
        %1751 = vmatprep.subr.mxu0 0.0
        %1752 = vmatpush2.msra.mxu0 0.0
        %1753 = vmatprep.mubr.f32.mxu0 0.0
        %1754 = vmatmul.mubr.f32.gmra.mxu0 %v598
        %v1755 = vpop.f32.mrf.mxu0
        %v1756 = vadd.f32 %v594, %v1755
        %v1757 = vpop.f32.mrf.mxu0
        %v1758 = vadd.f32 %v594, %v1757
        %1759 = vdwg.mxu0
        %v1760 = vtanh.pop %v1685
        %v1761 = vtanh.pop %v1687
        %v1762 = vtanh.pop %v1756
        %v1763 = vtanh.pop %v1758
        %v1764 = vadd.f32 %v1614, %v1760
        %v1765 = vadd.f32 %v1615, %v1761
        %v1766 = vadd.f32 %v1616, %v1762
        %v1767 = vadd.f32 %v1617, %v1763
        %v1768 = vadd.f32 %v1764, %v1760
        %v1769 = vadd.f32 %v1765, %v1761
        %v1770 = vadd.f32 %v1766, %v1762
        %v1771 = vadd.f32 %v1767, %v1763
        %v1772 = vmul.f32 %v1768, %v1498
        %v1773 = vmul.f32 %v1769, %v1499
        %v1774 = vmul.f32 %v1770, %v1500
        %v1775 = vmul.f32 %v1771, %v1501
        %v1776 = vrot.slane %v1772, 4
        %v1777 = vadd.f32 %v1772, %v1776
        %v1778 = vrot.slane %v1777, 2
        %v1779 = vadd.f32 %v1777, %v1778
        %v1780 = vrot.slane %v1779, 1
        %v1781 = vadd.f32 %v1779, %v1780
        %v1782 = vrot.slane %v1773, 4
        %v1783 = vadd.f32 %v1773, %v1782
        %v1784 = vrot.slane %v1783, 2
        %v1785 = vadd.f32 %v1783, %v1784
        %v1786 = vrot.slane %v1785, 1
        %v1787 = vadd.f32 %v1785, %v1786
        %v1788 = vrot.slane %v1774, 4
        %v1789 = vadd.f32 %v1774, %v1788
        %v1790 = vrot.slane %v1789, 2
        %v1791 = vadd.f32 %v1789, %v1790
        %v1792 = vrot.slane %v1791, 1
        %v1793 = vadd.f32 %v1791, %v1792
        %v1794 = vrot.slane %v1775, 4
        %v1795 = vadd.f32 %v1775, %v1794
        %v1796 = vrot.slane %v1795, 2
        %v1797 = vadd.f32 %v1795, %v1796
        %v1798 = vrot.slane %v1797, 1
        %v1799 = vadd.f32 %v1797, %v1798
        %v1800 = vadd.f32 %v1502, %v782
        %v1805 = vcombine.low %v1781, %v1787
        %v1806 = vcombine.low %v1793, %v1799
        %v1808 = vunpack.c.l.s4 1966171168
        %v1809 = vunpack.c.0.s8 %v1808
        %v1810 = vlaneseq
        %v1811 = vshrl.u32 %v1810, 7
        %v1812 = vsub.s32 %v1809, %v1811
        %v1813 = vrot.slane %v1805, %v1812
        %v1815 = vunpack.c.l.s4 1966171168
        %v1816 = vunpack.c.0.s8 %v1815
        %v1817 = vlaneseq
        %v1818 = vshrl.u32 %v1817, 7
        %v1819 = vsub.s32 %v1816, %v1818
        %v1820 = vrot.slane %v1806, %v1819
        %v1821 = vcombine.low %v1813, %v1820
        %v1823 = vunpack.c.l.s4 1966171168
        %v1824 = vunpack.c.0.s8 %v1823
        %v1825 = vlaneseq
        %v1826 = vshrl.u32 %v1825, 7
        %v1827 = vsub.s32 %v1824, %v1826
        %v1828 = vrot.slane %v1821, %v1827
        %v1830 = vsub.f32 %v1497, %v1828
        %v1831 = vrcp.pop %v1800
        %v1832 = vmul.f32 %v1830, %v1831
        %v1834 = vlaneseq
        %v1835 = vshrl.u32 %v1834, 7
        %v1836 = vsub.s32 0, %v1835
        %v1837 = vrot.slane %v1832, %v1836
        %v1838 = vlaneseq
        %v1839 = vshrl.u32 %v1838, 7
        %v1840 = vsub.s32 1, %v1839
        %v1841 = vrot.slane %v1832, %v1840
        %v1842 = vlaneseq
        %v1843 = vshrl.u32 %v1842, 7
        %v1844 = vsub.s32 2, %v1843
        %v1845 = vrot.slane %v1832, %v1844
        %v1846 = vlaneseq
        %v1847 = vshrl.u32 %v1846, 7
        %v1848 = vsub.s32 3, %v1847
        %v1849 = vrot.slane %v1832, %v1848
        %v1854 = vmul.f32 %v1837, %v1498
        %v1855 = vmul.f32 %v1841, %v1499
        %v1856 = vmul.f32 %v1845, %v1500
        %v1857 = vmul.f32 %v1849, %v1501
        %v1858 = vadd.f32 %v1764, %v1854
        %v1859 = vadd.f32 %v1765, %v1855
        %v1860 = vadd.f32 %v1766, %v1856
        %v1861 = vadd.f32 %v1767, %v1857
        %1862 = vmatprep.subr.mxu0 0.0
        %1863 = vmatpush1.msra.mxu0 0.0
        %1864 = vmatprep.subr.mxu0 0.0
        %1865 = vmatpush1.msra.mxu0 0.0
        %1866 = vmatprep.subr.mxu0 0.0
        %1867 = vmatpush1.msra.mxu0 0.0
        %1868 = vmatprep.subr.mxu0 0.0
        %1869 = vmatpush1.msra.mxu0 0.0
        %1870 = vmatprep.subr.mxu0 0.0
        %1871 = vmatpush1.msra.mxu0 0.0
        %1872 = vmatprep.subr.mxu0 0.0
        %1873 = vmatpush1.msra.mxu0 0.0
        %1874 = vmatprep.subr.mxu0 0.0
        %1875 = vmatpush1.msra.mxu0 0.0
        %1876 = vmatprep.subr.mxu0 0.0
        %1877 = vmatpush1.msra.mxu0 0.0
        %1878 = vmatprep.subr.mxu0 0.0
        %1879 = vmatpush1.msra.mxu0 0.0
        %1880 = vmatprep.subr.mxu0 0.0
        %1881 = vmatpush1.msra.mxu0 0.0
        %1882 = vmatprep.subr.mxu0 0.0
        %1883 = vmatpush1.msra.mxu0 0.0
        %1884 = vmatprep.subr.mxu0 0.0
        %1885 = vmatpush1.msra.mxu0 0.0
        %1886 = vmatprep.subr.mxu0 0.0
        %1887 = vmatpush1.msra.mxu0 0.0
        %1888 = vmatprep.subr.mxu0 0.0
        %1889 = vmatpush1.msra.mxu0 0.0
        %1890 = vmatprep.subr.mxu0 0.0
        %1891 = vmatpush1.msra.mxu0 0.0
        %1892 = vmatprep.subr.mxu0 %v1859
        %1893 = vmatpush1.msra.mxu0 %v1858
        %1894 = vmatprep.subr.mxu0 0.0
        %1895 = vmatpush2.msra.mxu0 0.0
        %1896 = vmatprep.subr.mxu0 0.0
        %1897 = vmatpush2.msra.mxu0 0.0
        %1898 = vmatprep.subr.mxu0 0.0
        %1899 = vmatpush2.msra.mxu0 0.0
        %1900 = vmatprep.subr.mxu0 0.0
        %1901 = vmatpush2.msra.mxu0 0.0
        %1902 = vmatprep.subr.mxu0 0.0
        %1903 = vmatpush2.msra.mxu0 0.0
        %1904 = vmatprep.subr.mxu0 0.0
        %1905 = vmatpush2.msra.mxu0 0.0
        %1906 = vmatprep.subr.mxu0 0.0
        %1907 = vmatpush2.msra.mxu0 0.0
        %1908 = vmatprep.subr.mxu0 0.0
        %1909 = vmatpush2.msra.mxu0 0.0
        %1910 = vmatprep.subr.mxu0 0.0
        %1911 = vmatpush2.msra.mxu0 0.0
        %1912 = vmatprep.subr.mxu0 0.0
        %1913 = vmatpush2.msra.mxu0 0.0
        %1914 = vmatprep.subr.mxu0 0.0
        %1915 = vmatpush2.msra.mxu0 0.0
        %1916 = vmatprep.subr.mxu0 0.0
        %1917 = vmatpush2.msra.mxu0 0.0
        %1918 = vmatprep.subr.mxu0 0.0
        %1919 = vmatpush2.msra.mxu0 0.0
        %1920 = vmatprep.subr.mxu0 0.0
        %1921 = vmatpush2.msra.mxu0 0.0
        %1922 = vmatprep.subr.mxu0 0.0
        %1923 = vmatpush2.msra.mxu0 0.0
        %1924 = vmatprep.subr.mxu0 0.0
        %1925 = vmatpush2.msra.mxu0 0.0
        %1926 = vmatprep.mubr.f32.mxu0 0.0
        %1927 = vmatmul.mubr.f32.gmra.mxu0 %v598
        %v1928 = vpop.f32.mrf.mxu0
        %v1929 = vadd.f32 %v594, %v1928
        %v1930 = vpop.f32.mrf.mxu0
        %v1931 = vadd.f32 %v594, %v1930
        %1932 = vdwg.mxu0
        %1933 = vmatprep.subr.mxu0 0.0
        %1934 = vmatpush1.msra.mxu0 0.0
        %1935 = vmatprep.subr.mxu0 0.0
        %1936 = vmatpush1.msra.mxu0 0.0
        %1937 = vmatprep.subr.mxu0 0.0
        %1938 = vmatpush1.msra.mxu0 0.0
        %1939 = vmatprep.subr.mxu0 0.0
        %1940 = vmatpush1.msra.mxu0 0.0
        %1941 = vmatprep.subr.mxu0 0.0
        %1942 = vmatpush1.msra.mxu0 0.0
        %1943 = vmatprep.subr.mxu0 0.0
        %1944 = vmatpush1.msra.mxu0 0.0
        %1945 = vmatprep.subr.mxu0 0.0
        %1946 = vmatpush1.msra.mxu0 0.0
        %1947 = vmatprep.subr.mxu0 0.0
        %1948 = vmatpush1.msra.mxu0 0.0
        %1949 = vmatprep.subr.mxu0 0.0
        %1950 = vmatpush1.msra.mxu0 0.0
        %1951 = vmatprep.subr.mxu0 0.0
        %1952 = vmatpush1.msra.mxu0 0.0
        %1953 = vmatprep.subr.mxu0 0.0
        %1954 = vmatpush1.msra.mxu0 0.0
        %1955 = vmatprep.subr.mxu0 0.0
        %1956 = vmatpush1.msra.mxu0 0.0
        %1957 = vmatprep.subr.mxu0 0.0
        %1958 = vmatpush1.msra.mxu0 0.0
        %1959 = vmatprep.subr.mxu0 0.0
        %1960 = vmatpush1.msra.mxu0 0.0
        %1961 = vmatprep.subr.mxu0 0.0
        %1962 = vmatpush1.msra.mxu0 0.0
        %1963 = vmatprep.subr.mxu0 %v1861
        %1964 = vmatpush1.msra.mxu0 %v1860
        %1965 = vmatprep.subr.mxu0 0.0
        %1966 = vmatpush2.msra.mxu0 0.0
        %1967 = vmatprep.subr.mxu0 0.0
        %1968 = vmatpush2.msra.mxu0 0.0
        %1969 = vmatprep.subr.mxu0 0.0
        %1970 = vmatpush2.msra.mxu0 0.0
        %1971 = vmatprep.subr.mxu0 0.0
        %1972 = vmatpush2.msra.mxu0 0.0
        %1973 = vmatprep.subr.mxu0 0.0
        %1974 = vmatpush2.msra.mxu0 0.0
        %1975 = vmatprep.subr.mxu0 0.0
        %1976 = vmatpush2.msra.mxu0 0.0
        %1977 = vmatprep.subr.mxu0 0.0
        %1978 = vmatpush2.msra.mxu0 0.0
        %1979 = vmatprep.subr.mxu0 0.0
        %1980 = vmatpush2.msra.mxu0 0.0
        %1981 = vmatprep.subr.mxu0 0.0
        %1982 = vmatpush2.msra.mxu0 0.0
        %1983 = vmatprep.subr.mxu0 0.0
        %1984 = vmatpush2.msra.mxu0 0.0
        %1985 = vmatprep.subr.mxu0 0.0
        %1986 = vmatpush2.msra.mxu0 0.0
        %1987 = vmatprep.subr.mxu0 0.0
        %1988 = vmatpush2.msra.mxu0 0.0
        %1989 = vmatprep.subr.mxu0 0.0
        %1990 = vmatpush2.msra.mxu0 0.0
        %1991 = vmatprep.subr.mxu0 0.0
        %1992 = vmatpush2.msra.mxu0 0.0
        %1993 = vmatprep.subr.mxu0 0.0
        %1994 = vmatpush2.msra.mxu0 0.0
        %1995 = vmatprep.subr.mxu0 0.0
        %1996 = vmatpush2.msra.mxu0 0.0
        %1997 = vmatprep.mubr.f32.mxu0 0.0
        %1998 = vmatmul.mubr.f32.gmra.mxu0 %v598
        %v1999 = vpop.f32.mrf.mxu0
        %v2000 = vadd.f32 %v594, %v1999
        %v2001 = vpop.f32.mrf.mxu0
        %v2002 = vadd.f32 %v594, %v2001
        %2003 = vdwg.mxu0
        %v2004 = vtanh.pop %v1929
        %v2005 = vtanh.pop %v1931
        %v2006 = vtanh.pop %v2000
        %v2007 = vtanh.pop %v2002
        %v2008 = vadd.f32 %v1858, %v2004
        %v2009 = vadd.f32 %v1859, %v2005
        %v2010 = vadd.f32 %v1860, %v2006
        %v2011 = vadd.f32 %v1861, %v2007
        %2012 = vst [vmem:[%s442 + $0x20] sm:$0xff] %v2008
        %2013 = vst [vmem:[%s442 + $0x28] sm:$0xff] %v2009
        %2014 = vst [vmem:[%s442 + $0x30] sm:$0xff] %v2010
        %2015 = vst [vmem:[%s442 + $0x38] sm:$0xff] %v2011
        %v2016 = vadd.f32 %v2008, %v2004
        %v2017 = vadd.f32 %v2009, %v2005
        %v2018 = vadd.f32 %v2010, %v2006
        %v2019 = vadd.f32 %v2011, %v2007
        %v2020 = vmul.f32 %v2016, %v1498
        %v2021 = vmul.f32 %v2017, %v1499
        %v2022 = vmul.f32 %v2018, %v1500
        %v2023 = vmul.f32 %v2019, %v1501
        %v2024 = vrot.slane %v2020, 4
        %v2025 = vadd.f32 %v2020, %v2024
        %v2026 = vrot.slane %v2025, 2
        %v2027 = vadd.f32 %v2025, %v2026
        %v2028 = vrot.slane %v2027, 1
        %v2029 = vadd.f32 %v2027, %v2028
        %v2030 = vrot.slane %v2021, 4
        %v2031 = vadd.f32 %v2021, %v2030
        %v2032 = vrot.slane %v2031, 2
        %v2033 = vadd.f32 %v2031, %v2032
        %v2034 = vrot.slane %v2033, 1
        %v2035 = vadd.f32 %v2033, %v2034
        %v2036 = vrot.slane %v2022, 4
        %v2037 = vadd.f32 %v2022, %v2036
        %v2038 = vrot.slane %v2037, 2
        %v2039 = vadd.f32 %v2037, %v2038
        %v2040 = vrot.slane %v2039, 1
        %v2041 = vadd.f32 %v2039, %v2040
        %v2042 = vrot.slane %v2023, 4
        %v2043 = vadd.f32 %v2023, %v2042
        %v2044 = vrot.slane %v2043, 2
        %v2045 = vadd.f32 %v2043, %v2044
        %v2046 = vrot.slane %v2045, 1
        %v2047 = vadd.f32 %v2045, %v2046
        %v2048 = vadd.f32 %v1502, %v1031
        %v2053 = vcombine.low %v2029, %v2035
        %v2054 = vcombine.low %v2041, %v2047
        %v2056 = vunpack.c.l.s4 1966171168
        %v2057 = vunpack.c.0.s8 %v2056
        %v2058 = vlaneseq
        %v2059 = vshrl.u32 %v2058, 7
        %v2060 = vsub.s32 %v2057, %v2059
        %v2061 = vrot.slane %v2053, %v2060
        %v2063 = vunpack.c.l.s4 1966171168
        %v2064 = vunpack.c.0.s8 %v2063
        %v2065 = vlaneseq
        %v2066 = vshrl.u32 %v2065, 7
        %v2067 = vsub.s32 %v2064, %v2066
        %v2068 = vrot.slane %v2054, %v2067
        %v2069 = vcombine.low %v2061, %v2068
        %v2071 = vunpack.c.l.s4 1966171168
        %v2072 = vunpack.c.0.s8 %v2071
        %v2073 = vlaneseq
        %v2074 = vshrl.u32 %v2073, 7
        %v2075 = vsub.s32 %v2072, %v2074
        %v2076 = vrot.slane %v2069, %v2075
        %v2078 = vsub.f32 %v1497, %v2076
        %v2079 = vrcp.pop %v2048
        %v2080 = vmul.f32 %v2078, %v2079
        %v2082 = vlaneseq
        %v2083 = vshrl.u32 %v2082, 7
        %v2084 = vsub.s32 0, %v2083
        %v2085 = vrot.slane %v2080, %v2084
        %v2086 = vlaneseq
        %v2087 = vshrl.u32 %v2086, 7
        %v2088 = vsub.s32 1, %v2087
        %v2089 = vrot.slane %v2080, %v2088
        %v2090 = vlaneseq
        %v2091 = vshrl.u32 %v2090, 7
        %v2092 = vsub.s32 2, %v2091
        %v2093 = vrot.slane %v2080, %v2092
        %v2094 = vlaneseq
        %v2095 = vshrl.u32 %v2094, 7
        %v2096 = vsub.s32 3, %v2095
        %v2097 = vrot.slane %v2080, %v2096
        %v2102 = vmul.f32 %v2085, %v1498
        %v2103 = vmul.f32 %v2089, %v1499
        %v2104 = vmul.f32 %v2093, %v1500
        %v2105 = vmul.f32 %v2097, %v1501
        %v2106 = vadd.f32 %v2008, %v2102
        %v2107 = vadd.f32 %v2009, %v2103
        %v2108 = vadd.f32 %v2010, %v2104
        %v2109 = vadd.f32 %v2011, %v2105
        %2110 = vmatprep.subr.mxu0 0.0
        %2111 = vmatpush1.msra.mxu0 0.0
        %2112 = vmatprep.subr.mxu0 0.0
        %2113 = vmatpush1.msra.mxu0 0.0
        %2114 = vmatprep.subr.mxu0 0.0
        %2115 = vmatpush1.msra.mxu0 0.0
        %2116 = vmatprep.subr.mxu0 0.0
        %2117 = vmatpush1.msra.mxu0 0.0
        %2118 = vmatprep.subr.mxu0 0.0
        %2119 = vmatpush1.msra.mxu0 0.0
        %2120 = vmatprep.subr.mxu0 0.0
        %2121 = vmatpush1.msra.mxu0 0.0
        %2122 = vmatprep.subr.mxu0 0.0
        %2123 = vmatpush1.msra.mxu0 0.0
        %2124 = vmatprep.subr.mxu0 0.0
        %2125 = vmatpush1.msra.mxu0 0.0
        %2126 = vmatprep.subr.mxu0 0.0
        %2127 = vmatpush1.msra.mxu0 0.0
        %2128 = vmatprep.subr.mxu0 0.0
        %2129 = vmatpush1.msra.mxu0 0.0
        %2130 = vmatprep.subr.mxu0 0.0
        %2131 = vmatpush1.msra.mxu0 0.0
        %2132 = vmatprep.subr.mxu0 0.0
        %2133 = vmatpush1.msra.mxu0 0.0
        %2134 = vmatprep.subr.mxu0 0.0
        %2135 = vmatpush1.msra.mxu0 0.0
        %2136 = vmatprep.subr.mxu0 0.0
        %2137 = vmatpush1.msra.mxu0 0.0
        %2138 = vmatprep.subr.mxu0 0.0
        %2139 = vmatpush1.msra.mxu0 0.0
        %2140 = vmatprep.subr.mxu0 %v2107
        %2141 = vmatpush1.msra.mxu0 %v2106
        %2142 = vmatprep.subr.mxu0 0.0
        %2143 = vmatpush2.msra.mxu0 0.0
        %2144 = vmatprep.subr.mxu0 0.0
        %2145 = vmatpush2.msra.mxu0 0.0
        %2146 = vmatprep.subr.mxu0 0.0
        %2147 = vmatpush2.msra.mxu0 0.0
        %2148 = vmatprep.subr.mxu0 0.0
        %2149 = vmatpush2.msra.mxu0 0.0
        %2150 = vmatprep.subr.mxu0 0.0
        %2151 = vmatpush2.msra.mxu0 0.0
        %2152 = vmatprep.subr.mxu0 0.0
        %2153 = vmatpush2.msra.mxu0 0.0
        %2154 = vmatprep.subr.mxu0 0.0
        %2155 = vmatpush2.msra.mxu0 0.0
        %2156 = vmatprep.subr.mxu0 0.0
        %2157 = vmatpush2.msra.mxu0 0.0
        %2158 = vmatprep.subr.mxu0 0.0
        %2159 = vmatpush2.msra.mxu0 0.0
        %2160 = vmatprep.subr.mxu0 0.0
        %2161 = vmatpush2.msra.mxu0 0.0
        %2162 = vmatprep.subr.mxu0 0.0
        %2163 = vmatpush2.msra.mxu0 0.0
        %2164 = vmatprep.subr.mxu0 0.0
        %2165 = vmatpush2.msra.mxu0 0.0
        %2166 = vmatprep.subr.mxu0 0.0
        %2167 = vmatpush2.msra.mxu0 0.0
        %2168 = vmatprep.subr.mxu0 0.0
        %2169 = vmatpush2.msra.mxu0 0.0
        %2170 = vmatprep.subr.mxu0 0.0
        %2171 = vmatpush2.msra.mxu0 0.0
        %2172 = vmatprep.subr.mxu0 0.0
        %2173 = vmatpush2.msra.mxu0 0.0
        %2174 = vmatprep.mubr.f32.mxu0 0.0
        %2175 = vmatmul.mubr.f32.gmra.mxu0 %v598
        %v2176 = vpop.f32.mrf.mxu0
        %v2177 = vadd.f32 %v594, %v2176
        %v2178 = vpop.f32.mrf.mxu0
        %v2179 = vadd.f32 %v594, %v2178
        %2180 = vdwg.mxu0
        %2181 = vmatprep.subr.mxu0 0.0
        %2182 = vmatpush1.msra.mxu0 0.0
        %2183 = vmatprep.subr.mxu0 0.0
        %2184 = vmatpush1.msra.mxu0 0.0
        %2185 = vmatprep.subr.mxu0 0.0
        %2186 = vmatpush1.msra.mxu0 0.0
        %2187 = vmatprep.subr.mxu0 0.0
        %2188 = vmatpush1.msra.mxu0 0.0
        %2189 = vmatprep.subr.mxu0 0.0
        %2190 = vmatpush1.msra.mxu0 0.0
        %2191 = vmatprep.subr.mxu0 0.0
        %2192 = vmatpush1.msra.mxu0 0.0
        %2193 = vmatprep.subr.mxu0 0.0
        %2194 = vmatpush1.msra.mxu0 0.0
        %2195 = vmatprep.subr.mxu0 0.0
        %2196 = vmatpush1.msra.mxu0 0.0
        %2197 = vmatprep.subr.mxu0 0.0
        %2198 = vmatpush1.msra.mxu0 0.0
        %2199 = vmatprep.subr.mxu0 0.0
        %2200 = vmatpush1.msra.mxu0 0.0
        %2201 = vmatprep.subr.mxu0 0.0
        %2202 = vmatpush1.msra.mxu0 0.0
        %2203 = vmatprep.subr.mxu0 0.0
        %2204 = vmatpush1.msra.mxu0 0.0
        %2205 = vmatprep.subr.mxu0 0.0
        %2206 = vmatpush1.msra.mxu0 0.0
        %2207 = vmatprep.subr.mxu0 0.0
        %2208 = vmatpush1.msra.mxu0 0.0
        %2209 = vmatprep.subr.mxu0 0.0
        %2210 = vmatpush1.msra.mxu0 0.0
        %2211 = vmatprep.subr.mxu0 %v2109
        %2212 = vmatpush1.msra.mxu0 %v2108
        %2213 = vmatprep.subr.mxu0 0.0
        %2214 = vmatpush2.msra.mxu0 0.0
        %2215 = vmatprep.subr.mxu0 0.0
        %2216 = vmatpush2.msra.mxu0 0.0
        %2217 = vmatprep.subr.mxu0 0.0
        %2218 = vmatpush2.msra.mxu0 0.0
        %2219 = vmatprep.subr.mxu0 0.0
        %2220 = vmatpush2.msra.mxu0 0.0
        %2221 = vmatprep.subr.mxu0 0.0
        %2222 = vmatpush2.msra.mxu0 0.0
        %2223 = vmatprep.subr.mxu0 0.0
        %2224 = vmatpush2.msra.mxu0 0.0
        %2225 = vmatprep.subr.mxu0 0.0
        %2226 = vmatpush2.msra.mxu0 0.0
        %2227 = vmatprep.subr.mxu0 0.0
        %2228 = vmatpush2.msra.mxu0 0.0
        %2229 = vmatprep.subr.mxu0 0.0
        %2230 = vmatpush2.msra.mxu0 0.0
        %2231 = vmatprep.subr.mxu0 0.0
        %2232 = vmatpush2.msra.mxu0 0.0
        %2233 = vmatprep.subr.mxu0 0.0
        %2234 = vmatpush2.msra.mxu0 0.0
        %2235 = vmatprep.subr.mxu0 0.0
        %2236 = vmatpush2.msra.mxu0 0.0
        %2237 = vmatprep.subr.mxu0 0.0
        %2238 = vmatpush2.msra.mxu0 0.0
        %2239 = vmatprep.subr.mxu0 0.0
        %2240 = vmatpush2.msra.mxu0 0.0
        %2241 = vmatprep.subr.mxu0 0.0
        %2242 = vmatpush2.msra.mxu0 0.0
        %2243 = vmatprep.subr.mxu0 0.0
        %2244 = vmatpush2.msra.mxu0 0.0
        %2245 = vmatprep.mubr.f32.mxu0 0.0
        %2246 = vmatmul.mubr.f32.gmra.mxu0 %v598
        %v2247 = vpop.f32.mrf.mxu0
        %v2248 = vadd.f32 %v594, %v2247
        %v2249 = vpop.f32.mrf.mxu0
        %v2250 = vadd.f32 %v594, %v2249
        %2251 = vdwg.mxu0
        %v2252 = vtanh.pop %v2177
        %v2253 = vtanh.pop %v2179
        %v2254 = vtanh.pop %v2248
        %v2255 = vtanh.pop %v2250
        %v2256 = vadd.f32 %v2106, %v2252
        %v2257 = vadd.f32 %v2107, %v2253
        %v2258 = vadd.f32 %v2108, %v2254
        %v2259 = vadd.f32 %v2109, %v2255
        %2260 = vst [vmem:[%s449 + $0x20] sm:$0xff] %v2256
        %2261 = vst [vmem:[%s449 + $0x28] sm:$0xff] %v2257
        %2262 = vst [vmem:[%s449 + $0x30] sm:$0xff] %v2258
        %2263 = vst [vmem:[%s449 + $0x38] sm:$0xff] %v2259
        %v2264 = vadd.f32 %v2256, %v2252
        %v2265 = vadd.f32 %v2257, %v2253
        %v2266 = vadd.f32 %v2258, %v2254
        %v2267 = vadd.f32 %v2259, %v2255
        %v2268 = vmul.f32 %v2264, %v1498
        %v2269 = vmul.f32 %v2265, %v1499
        %v2270 = vmul.f32 %v2266, %v1500
        %v2271 = vmul.f32 %v2267, %v1501
        %v2272 = vrot.slane %v2268, 4
        %v2273 = vadd.f32 %v2268, %v2272
        %v2274 = vrot.slane %v2273, 2
        %v2275 = vadd.f32 %v2273, %v2274
        %v2276 = vrot.slane %v2275, 1
        %v2277 = vadd.f32 %v2275, %v2276
        %v2278 = vrot.slane %v2269, 4
        %v2279 = vadd.f32 %v2269, %v2278
        %v2280 = vrot.slane %v2279, 2
        %v2281 = vadd.f32 %v2279, %v2280
        %v2282 = vrot.slane %v2281, 1
        %v2283 = vadd.f32 %v2281, %v2282
        %v2284 = vrot.slane %v2270, 4
        %v2285 = vadd.f32 %v2270, %v2284
        %v2286 = vrot.slane %v2285, 2
        %v2287 = vadd.f32 %v2285, %v2286
        %v2288 = vrot.slane %v2287, 1
        %v2289 = vadd.f32 %v2287, %v2288
        %v2290 = vrot.slane %v2271, 4
        %v2291 = vadd.f32 %v2271, %v2290
        %v2292 = vrot.slane %v2291, 2
        %v2293 = vadd.f32 %v2291, %v2292
        %v2294 = vrot.slane %v2293, 1
        %v2295 = vadd.f32 %v2293, %v2294
        %v2296 = vadd.f32 %v1502, %v1280
        %v2301 = vcombine.low %v2277, %v2283
        %v2302 = vcombine.low %v2289, %v2295
        %v2304 = vunpack.c.l.s4 1966171168
        %v2305 = vunpack.c.0.s8 %v2304
        %v2306 = vlaneseq
        %v2307 = vshrl.u32 %v2306, 7
        %v2308 = vsub.s32 %v2305, %v2307
        %v2309 = vrot.slane %v2301, %v2308
        %v2311 = vunpack.c.l.s4 1966171168
        %v2312 = vunpack.c.0.s8 %v2311
        %v2313 = vlaneseq
        %v2314 = vshrl.u32 %v2313, 7
        %v2315 = vsub.s32 %v2312, %v2314
        %v2316 = vrot.slane %v2302, %v2315
        %v2317 = vcombine.low %v2309, %v2316
        %v2319 = vunpack.c.l.s4 1966171168
        %v2320 = vunpack.c.0.s8 %v2319
        %v2321 = vlaneseq
        %v2322 = vshrl.u32 %v2321, 7
        %v2323 = vsub.s32 %v2320, %v2322
        %v2324 = vrot.slane %v2317, %v2323
        %v2326 = vsub.f32 %v1497, %v2324
        %v2327 = vrcp.pop %v2296
        %v2328 = vmul.f32 %v2326, %v2327
        %v2330 = vlaneseq
        %v2331 = vshrl.u32 %v2330, 7
        %v2332 = vsub.s32 0, %v2331
        %v2333 = vrot.slane %v2328, %v2332
        %v2334 = vlaneseq
        %v2335 = vshrl.u32 %v2334, 7
        %v2336 = vsub.s32 1, %v2335
        %v2337 = vrot.slane %v2328, %v2336
        %v2338 = vlaneseq
        %v2339 = vshrl.u32 %v2338, 7
        %v2340 = vsub.s32 2, %v2339
        %v2341 = vrot.slane %v2328, %v2340
        %v2342 = vlaneseq
        %v2343 = vshrl.u32 %v2342, 7
        %v2344 = vsub.s32 3, %v2343
        %v2345 = vrot.slane %v2328, %v2344
        %v2350 = vmul.f32 %v2333, %v1498
        %v2351 = vmul.f32 %v2337, %v1499
        %v2352 = vmul.f32 %v2341, %v1500
        %v2353 = vmul.f32 %v2345, %v1501
        %v2354 = vadd.f32 %v2256, %v2350
        %v2355 = vadd.f32 %v2257, %v2351
        %v2356 = vadd.f32 %v2258, %v2352
        %v2357 = vadd.f32 %v2259, %v2353
        %2358 = vmatprep.subr.mxu0 0.0
        %2359 = vmatpush1.msra.mxu0 0.0
        %2360 = vmatprep.subr.mxu0 0.0
        %2361 = vmatpush1.msra.mxu0 0.0
        %2362 = vmatprep.subr.mxu0 0.0
        %2363 = vmatpush1.msra.mxu0 0.0
        %2364 = vmatprep.subr.mxu0 0.0
        %2365 = vmatpush1.msra.mxu0 0.0
        %2366 = vmatprep.subr.mxu0 0.0
        %2367 = vmatpush1.msra.mxu0 0.0
        %2368 = vmatprep.subr.mxu0 0.0
        %2369 = vmatpush1.msra.mxu0 0.0
        %2370 = vmatprep.subr.mxu0 0.0
        %2371 = vmatpush1.msra.mxu0 0.0
        %2372 = vmatprep.subr.mxu0 0.0
        %2373 = vmatpush1.msra.mxu0 0.0
        %2374 = vmatprep.subr.mxu0 0.0
        %2375 = vmatpush1.msra.mxu0 0.0
        %2376 = vmatprep.subr.mxu0 0.0
        %2377 = vmatpush1.msra.mxu0 0.0
        %2378 = vmatprep.subr.mxu0 0.0
        %2379 = vmatpush1.msra.mxu0 0.0
        %2380 = vmatprep.subr.mxu0 0.0
        %2381 = vmatpush1.msra.mxu0 0.0
        %2382 = vmatprep.subr.mxu0 0.0
        %2383 = vmatpush1.msra.mxu0 0.0
        %2384 = vmatprep.subr.mxu0 0.0
        %2385 = vmatpush1.msra.mxu0 0.0
        %2386 = vmatprep.subr.mxu0 0.0
        %2387 = vmatpush1.msra.mxu0 0.0
        %2388 = vmatprep.subr.mxu0 %v2355
        %2389 = vmatpush1.msra.mxu0 %v2354
        %2390 = vmatprep.subr.mxu0 0.0
        %2391 = vmatpush2.msra.mxu0 0.0
        %2392 = vmatprep.subr.mxu0 0.0
        %2393 = vmatpush2.msra.mxu0 0.0
        %2394 = vmatprep.subr.mxu0 0.0
        %2395 = vmatpush2.msra.mxu0 0.0
        %2396 = vmatprep.subr.mxu0 0.0
        %2397 = vmatpush2.msra.mxu0 0.0
        %2398 = vmatprep.subr.mxu0 0.0
        %2399 = vmatpush2.msra.mxu0 0.0
        %2400 = vmatprep.subr.mxu0 0.0
        %2401 = vmatpush2.msra.mxu0 0.0
        %2402 = vmatprep.subr.mxu0 0.0
        %2403 = vmatpush2.msra.mxu0 0.0
        %2404 = vmatprep.subr.mxu0 0.0
        %2405 = vmatpush2.msra.mxu0 0.0
        %2406 = vmatprep.subr.mxu0 0.0
        %2407 = vmatpush2.msra.mxu0 0.0
        %2408 = vmatprep.subr.mxu0 0.0
        %2409 = vmatpush2.msra.mxu0 0.0
        %2410 = vmatprep.subr.mxu0 0.0
        %2411 = vmatpush2.msra.mxu0 0.0
        %2412 = vmatprep.subr.mxu0 0.0
        %2413 = vmatpush2.msra.mxu0 0.0
        %2414 = vmatprep.subr.mxu0 0.0
        %2415 = vmatpush2.msra.mxu0 0.0
        %2416 = vmatprep.subr.mxu0 0.0
        %2417 = vmatpush2.msra.mxu0 0.0
        %2418 = vmatprep.subr.mxu0 0.0
        %2419 = vmatpush2.msra.mxu0 0.0
        %2420 = vmatprep.subr.mxu0 0.0
        %2421 = vmatpush2.msra.mxu0 0.0
        %2422 = vmatprep.mubr.f32.mxu0 0.0
        %2423 = vmatmul.mubr.f32.gmra.mxu0 %v598
        %v2424 = vpop.f32.mrf.mxu0
        %v2425 = vadd.f32 %v594, %v2424
        %v2426 = vpop.f32.mrf.mxu0
        %v2427 = vadd.f32 %v594, %v2426
        %2428 = vdwg.mxu0
        %2429 = vmatprep.subr.mxu0 0.0
        %2430 = vmatpush1.msra.mxu0 0.0
        %2431 = vmatprep.subr.mxu0 0.0
        %2432 = vmatpush1.msra.mxu0 0.0
        %2433 = vmatprep.subr.mxu0 0.0
        %2434 = vmatpush1.msra.mxu0 0.0
        %2435 = vmatprep.subr.mxu0 0.0
        %2436 = vmatpush1.msra.mxu0 0.0
        %2437 = vmatprep.subr.mxu0 0.0
        %2438 = vmatpush1.msra.mxu0 0.0
        %2439 = vmatprep.subr.mxu0 0.0
        %2440 = vmatpush1.msra.mxu0 0.0
        %2441 = vmatprep.subr.mxu0 0.0
        %2442 = vmatpush1.msra.mxu0 0.0
        %2443 = vmatprep.subr.mxu0 0.0
        %2444 = vmatpush1.msra.mxu0 0.0
        %2445 = vmatprep.subr.mxu0 0.0
        %2446 = vmatpush1.msra.mxu0 0.0
        %2447 = vmatprep.subr.mxu0 0.0
        %2448 = vmatpush1.msra.mxu0 0.0
        %2449 = vmatprep.subr.mxu0 0.0
        %2450 = vmatpush1.msra.mxu0 0.0
        %2451 = vmatprep.subr.mxu0 0.0
        %2452 = vmatpush1.msra.mxu0 0.0
        %2453 = vmatprep.subr.mxu0 0.0
        %2454 = vmatpush1.msra.mxu0 0.0
        %2455 = vmatprep.subr.mxu0 0.0
        %2456 = vmatpush1.msra.mxu0 0.0
        %2457 = vmatprep.subr.mxu0 0.0
        %2458 = vmatpush1.msra.mxu0 0.0
        %2459 = vmatprep.subr.mxu0 %v2357
        %2460 = vmatpush1.msra.mxu0 %v2356
        %2461 = vmatprep.subr.mxu0 0.0
        %2462 = vmatpush2.msra.mxu0 0.0
        %2463 = vmatprep.subr.mxu0 0.0
        %2464 = vmatpush2.msra.mxu0 0.0
        %2465 = vmatprep.subr.mxu0 0.0
        %2466 = vmatpush2.msra.mxu0 0.0
        %2467 = vmatprep.subr.mxu0 0.0
        %2468 = vmatpush2.msra.mxu0 0.0
        %2469 = vmatprep.subr.mxu0 0.0
        %2470 = vmatpush2.msra.mxu0 0.0
        %2471 = vmatprep.subr.mxu0 0.0
        %2472 = vmatpush2.msra.mxu0 0.0
        %2473 = vmatprep.subr.mxu0 0.0
        %2474 = vmatpush2.msra.mxu0 0.0
        %2475 = vmatprep.subr.mxu0 0.0
        %2476 = vmatpush2.msra.mxu0 0.0
        %2477 = vmatprep.subr.mxu0 0.0
        %2478 = vmatpush2.msra.mxu0 0.0
        %2479 = vmatprep.subr.mxu0 0.0
        %2480 = vmatpush2.msra.mxu0 0.0
        %2481 = vmatprep.subr.mxu0 0.0
        %2482 = vmatpush2.msra.mxu0 0.0
        %2483 = vmatprep.subr.mxu0 0.0
        %2484 = vmatpush2.msra.mxu0 0.0
        %2485 = vmatprep.subr.mxu0 0.0
        %2486 = vmatpush2.msra.mxu0 0.0
        %2487 = vmatprep.subr.mxu0 0.0
        %2488 = vmatpush2.msra.mxu0 0.0
        %2489 = vmatprep.subr.mxu0 0.0
        %2490 = vmatpush2.msra.mxu0 0.0
        %2491 = vmatprep.subr.mxu0 0.0
        %2492 = vmatpush2.msra.mxu0 0.0
        %2493 = vmatprep.mubr.f32.mxu0 0.0
        %2494 = vmatmul.mubr.f32.gmra.mxu0 %v598
        %v2495 = vpop.f32.mrf.mxu0
        %v2496 = vadd.f32 %v594, %v2495
        %v2497 = vpop.f32.mrf.mxu0
        %v2498 = vadd.f32 %v594, %v2497
        %2499 = vdwg.mxu0
        %v2500 = vtanh.pop %v2425
        %v2501 = vtanh.pop %v2427
        %v2502 = vtanh.pop %v2496
        %v2503 = vtanh.pop %v2498
        %v2504 = vadd.f32 %v2354, %v2500
        %v2505 = vadd.f32 %v2355, %v2501
        %v2506 = vadd.f32 %v2356, %v2502
        %v2507 = vadd.f32 %v2357, %v2503
        %2508 = vst [vmem:[%s456 + $0x20] sm:$0xff] %v2504
        %2509 = vst [vmem:[%s456 + $0x28] sm:$0xff] %v2505
        %2510 = vst [vmem:[%s456 + $0x30] sm:$0xff] %v2506
        %2511 = vst [vmem:[%s456 + $0x38] sm:$0xff] %v2507
        %s2512 = sand.u32 %s202, 1
        %s2513 = scalar_lea.sflag [#allocation4], %s2512
        %s2514 = sand.u32 %s202, 1
        %s2515 = smul.addr %s2514, 64
        %s2516 = scalar_lea.vmem [#allocation10], %s2515
        %s2517 = sand.u32 %s33, 1
        %s2518 = scalar_lea.sflag [#allocation12], %s2517
        %s2519 = sand.u32 %s230, 1
        %s2520 = smul.addr %s2519, 64
        %s2521 = scalar_lea.vmem [#allocation11], %s2520
        %s2522 = sand.u32 %s33, 1
        %s2523 = scalar_lea.sflag [#allocation12], %s2522
        %s2524 = sand.u32 %s258, 1
        %s2525 = smul.addr %s2524, 64
        %s2526 = scalar_lea.vmem [#allocation13], %s2525
        // Predicated region
        $region61: #{tpu_custom_call.1} parent=43 // pred_check
          %p2527 = pneg %p212
        $region62: #{tpu_custom_call.1} parent=43 // pred_check_branch
          %2529 = sbr.rel (%p2527) target = $region64
        $region63: #{tpu_custom_call.1} parent=43 // pred_region
          %s2530 = smul.u32 8, %s37
          %s2532 = ssub.s32 1024, 1024
          %2533 = vsyncadd %s2513, %s2532
          %s2534 = smul.addr %s38, 8
          %s2535 = sadd.s32 %s2530, %s2534
          %s2536 = smul.addr %s2535, 128
          %s2537 = scalar_lea.hbm %s6, %s2536
          %s2539 = sshll.u32 %s2516, 4
          %s2540 = int_to_ptr.vmem [resolvable:$true] %s2539
          %2542 = dma.vmem_to_hbm [thread:$0]  %s2540, 1024, %s2537, %s2513
        $region64: #{tpu_custom_call.1} parent=43 // pred_fallthru
          _
        // Predicated region
        $region65: #{tpu_custom_call.1} parent=43 // pred_check
          %p2543 = pneg %p240
        $region66: #{tpu_custom_call.1} parent=43 // pred_check_branch
          %2545 = sbr.rel (%p2543) target = $region68
        $region67: #{tpu_custom_call.1} parent=43 // pred_region
          %s2546 = smul.u32 8, %s37
          %s2548 = ssub.s32 1024, 1024
          %2549 = vsyncadd %s2518, %s2548
          %s2550 = smul.addr %s38, 8
          %s2551 = sadd.s32 %s2546, %s2550
          %s2552 = smul.addr %s2551, 128
          %s2553 = scalar_lea.hbm %s7, %s2552
          %s2555 = sshll.u32 %s2521, 4
          %s2556 = int_to_ptr.vmem [resolvable:$true] %s2555
          %2558 = dma.vmem_to_hbm [thread:$0]  %s2556, 1024, %s2553, %s2518
        $region68: #{tpu_custom_call.1} parent=43 // pred_fallthru
          _
        // Predicated region
        $region69: #{tpu_custom_call.1} parent=43 // pred_check
          %p2559 = pneg %p268
        $region70: #{tpu_custom_call.1} parent=43 // pred_check_branch
          %2561 = sbr.rel (%p2559) target = $region72
        $region71: #{tpu_custom_call.1} parent=43 // pred_region
          %s2562 = smul.u32 8, %s37
          %s2564 = ssub.s32 1024, 1024
          %2565 = vsyncadd %s2523, %s2564
          %s2566 = smul.addr %s38, 8
          %s2567 = sadd.s32 %s2562, %s2566
          %s2568 = smul.addr %s2567, 128
          %s2569 = scalar_lea.hbm %s8, %s2568
          %s2571 = sshll.u32 %s2526, 4
          %s2572 = int_to_ptr.vmem [resolvable:$true] %s2571
          %2574 = dma.vmem_to_hbm [thread:$0]  %s2572, 1024, %s2569, %s2523
        $region72: #{tpu_custom_call.1} parent=43 // pred_fallthru
          _
      $region44: #{tpu_custom_call.1} parent=5 // pred_fallthru
        _
      %p2575 = scmp.le.s32.totalorder 2, %s28
      // Predicated region
      $region73: #{tpu_custom_call.1} parent=5 // pred_check
        %p2576 = pneg %p2575
      $region74: #{tpu_custom_call.1} parent=5 // pred_check_branch
        %2578 = sbr.rel (%p2576) target = $region76
      $region75: #{tpu_custom_call.1} parent=5 // pred_region
        %s2579 = ssub.s32 %s28, 2
        // Predicated region
        $region77: #{tpu_custom_call.1} parent=75 // pred_check
          %p2580 = pneg %p218
        $region78: #{tpu_custom_call.1} parent=75 // pred_check_branch
          %2582 = sbr.rel (%p2580) target = $region80
        $region79: #{tpu_custom_call.1} parent=75 // pred_region
          %s2583 = sand.u32 %s203, 1
          %s2584 = scalar_lea.sflag [#allocation4], %s2583
          %s2585 = sand.u32 %s203, 1
          %s2586 = smul.addr %s2585, 64
          %s2587 = scalar_lea.vmem [#allocation10], %s2586
          %2588 = dma.done %s2584, 1024
        $region80: #{tpu_custom_call.1} parent=75 // pred_fallthru
          _
        // Predicated region
        $region81: #{tpu_custom_call.1} parent=75 // pred_check
          %p2589 = pneg %p246
        $region82: #{tpu_custom_call.1} parent=75 // pred_check_branch
          %2591 = sbr.rel (%p2589) target = $region84
        $region83: #{tpu_custom_call.1} parent=75 // pred_region
          %s2592 = sand.u32 %s34, 1
          %s2593 = scalar_lea.sflag [#allocation12], %s2592
          %s2594 = sand.u32 %s231, 1
          %s2595 = smul.addr %s2594, 64
          %s2596 = scalar_lea.vmem [#allocation11], %s2595
          %2597 = dma.done %s2593, 1024
        $region84: #{tpu_custom_call.1} parent=75 // pred_fallthru
          _
        // Predicated region
        $region85: #{tpu_custom_call.1} parent=75 // pred_check
          %p2598 = pneg %p274
        $region86: #{tpu_custom_call.1} parent=75 // pred_check_branch
          %2600 = sbr.rel (%p2598) target = $region88
        $region87: #{tpu_custom_call.1} parent=75 // pred_region
          %s2601 = sand.u32 %s34, 1
          %s2602 = scalar_lea.sflag [#allocation12], %s2601
          %s2603 = sand.u32 %s259, 1
          %s2604 = smul.addr %s2603, 64
          %s2605 = scalar_lea.vmem [#allocation13], %s2604
          %2606 = dma.done %s2602, 1024
        $region88: #{tpu_custom_call.1} parent=75 // pred_fallthru
          _
      $region76: #{tpu_custom_call.1} parent=5 // pred_fallthru
        _
    $region6: #{tpu_custom_call.1} parent=1 // loop_footer
      %s32 = sadd.s32 1, %s28
    $region7: #{tpu_custom_call.1} parent=1 // loop_footer_branch
      %27 = sbr.rel target = $region3
    $region8: #{tpu_custom_call.1} parent=1 // loop_exit
      _
    %2607 = vsyncpa [#allocation3], 1
    %s2608 = scalar_lea.sflag [#allocation3], 1
    %2609 = vsyncpa %s2608, 1
    %2610 = vsyncpa [#allocation8], 1
    %s2611 = scalar_lea.sflag [#allocation8], 1
    %2612 = vsyncpa %s2611, 1
    %2613 = vsyncpa [#allocation4], 1
    %s2614 = scalar_lea.sflag [#allocation4], 1
    %2615 = vsyncpa %s2614, 1
    %2616 = vsyncpa [#allocation12], 1
    %s2617 = scalar_lea.sflag [#allocation12], 1
    %2618 = vsyncpa %s2617, 1
    %2619 = vsyncpa [#allocation5], 1
    %s2620 = scalar_lea.sflag [#allocation5], 1
    %2621 = vsyncpa %s2620, 1

</llo_original>
